<compile_context>
chip_gen: v7x
topology: tpu7x:2x2x1
jax: 0.10.0
libtpu: 0.0.40
codegen_flags: <defaults>
</compile_context>

<pallas_src>
import jax
import jax.numpy as jnp
from jax.experimental import pallas as pl
from jax.experimental.pallas import tpu as pltpu

HID = 128   # width of fc1 / afc / attention unit
MID = 64    # width of attfc2


def _round_up(x, m):
    return ((x + m - 1) // m) * m


def fnet6_5_kernel(vx_ref, ax_ref,
                   w_fc1_ref, b_fc1_ref, bn1_s_ref, bn1_b_ref,
                   w_afc_ref, b_afc_ref, bn2_s_ref, bn2_b_ref,
                   w_am1_ref, b_am1_ref, w_am2_ref, b_am2_ref,
                   w_f2_ref, b_f2_ref, w_f3_ref, b_f3_ref,
                   att_out_ref, vout_ref, aout_ref,
                   attx_ref, vo1_ref, axn_ref):
    f32 = jnp.float32

    # vo1 = bn1(relu(fc1(vx)))   (BN folded into scale/shift)
    h = jnp.dot(vx_ref[...], w_fc1_ref[...], preferred_element_type=f32)
    h = jnp.maximum(h + b_fc1_ref[...], 0.0)
    vo1 = h * bn1_s_ref[...] + bn1_b_ref[...]

    # ax_n = bn2(relu(afc(ax)))
    g = jnp.dot(ax_ref[...], w_afc_ref[...], preferred_element_type=f32)
    g = jnp.maximum(g + b_afc_ref[...], 0.0)
    axn = g * bn2_s_ref[...] + bn2_b_ref[...]

    # Attention unit: one fused K=256 matmul over the lane-concatenated input
    # (fills the 256-deep contraction of the v6e/v7x MXU in a single dot).
    cat = jnp.concatenate([vo1, axn], axis=-1)                       # (bm, 256)
    ah = jnp.dot(cat, w_am1_ref[...], preferred_element_type=f32)
    ah = jnp.maximum(ah + b_am1_ref[...], 0.0)
    att = jnp.dot(ah, w_am2_ref[...], preferred_element_type=f32) + b_am2_ref[...]
    att_x = att + vo1

    # Shared scoring head: attfc3(relu(attfc2(x))); dropout == identity in eval.
    w_f2 = w_f2_ref[...]          # (128, 64)
    b_f2 = b_f2_ref[...]          # (1, 64)
    w_f3 = w_f3_ref[...]          # (1, 64)  attfc3 weight as a row
    b_f3 = b_f3_ref[...]          # (1, 1)

    def head(x):
        t = jnp.dot(x, w_f2, preferred_element_type=f32)
        t = jnp.maximum(t + b_f2, 0.0)
        # attfc3 has a single output unit -> lane-reduce instead of an N=1 matmul.
        return jnp.sum(t * w_f3, axis=-1, keepdims=True) + b_f3

    att_out_ref[...] = head(att_x).astype(att_out_ref.dtype)
    vout_ref[...] = head(vo1).astype(vout_ref.dtype)
    aout_ref[...] = head(axn).astype(aout_ref.dtype)
    attx_ref[...] = att_x.astype(attx_ref.dtype)
    vo1_ref[...] = vo1.astype(vo1_ref.dtype)
    axn_ref[...] = axn.astype(axn_ref.dtype)


def prepare_params(p, eps=1e-5):
    """One-time parameter preparation (weight transposes + BN folding).

    Hoisted out of the per-forward path so no per-call transpose passes over the
    weights in HBM are paid at inference time.
    """
    def fold_bn(g, b, m, v):
        s = g / jnp.sqrt(v + eps)
        return s.reshape(1, -1), (b - m * s).reshape(1, -1)

    bn1_s, bn1_b = fold_bn(p["bn1_gamma"], p["bn1_beta"], p["bn1_mean"], p["bn1_var"])
    bn2_s, bn2_b = fold_bn(p["bn2_gamma"], p["bn2_beta"], p["bn2_mean"], p["bn2_var"])
    return (
        jnp.transpose(p["w_fc1"]),          # (feature_dim, 128)
        p["b_fc1"].reshape(1, -1),
        bn1_s, bn1_b,
        jnp.transpose(p["w_afc"]),          # (128, 128)
        p["b_afc"].reshape(1, -1),
        bn2_s, bn2_b,
        jnp.transpose(p["w_am1"]),          # (256, 128)  AM fc1 on concat, K=256
        p["b_am1"].reshape(1, -1),
        jnp.transpose(p["w_am2"]),          # (128, 128)
        p["b_am2"].reshape(1, -1),
        jnp.transpose(p["w_attfc2"]),       # (128, 64)
        p["b_attfc2"].reshape(1, -1),
        p["w_attfc3"].reshape(1, -1),       # (1, 64)
        p["b_attfc3"].reshape(1, 1),        # (1, 1)
    )


def fnet6_5_forward(vx, ax, prepared, *, block_m=None):
    """vx: (B, feature_dim), ax: (B, 128), prepared = prepare_params(raw)."""
    B, feat = vx.shape
    assert ax.shape == (B, HID)

    # Large M tiles amortize the ~0.35 us/grid-step overhead and fill the MXU M
    # dimension.  512 rows keeps double-buffered tiles + resident weights well
    # inside the default scoped VMEM on v5e/v6e/v7x; raise vmem_limit_bytes via
    # CompilerParams if pushing block_m higher.
    if block_m is None:
        block_m = min(512, _round_up(B, 8))
    block_m = max(8, _round_up(block_m, 8))

    Bp = _round_up(B, block_m)
    if Bp != B:
        pad = Bp - B
        vx = jnp.pad(vx, ((0, pad), (0, 0)))
        ax = jnp.pad(ax, ((0, pad), (0, 0)))

    grid = (Bp // block_m,)
    dt = vx.dtype

    def row_spec(f):
        return pl.BlockSpec((block_m, f), lambda i: (i, 0))

    def const_spec(arr):
        return pl.BlockSpec(arr.shape, lambda i: (0, 0))

    in_specs = [row_spec(feat), row_spec(HID)] + [const_spec(a) for a in prepared]
    out_specs = (
        row_spec(1), row_spec(1), row_spec(1),
        row_spec(HID), row_spec(HID), row_spec(HID),
    )
    out_shape = (
        jax.ShapeDtypeStruct((Bp, 1), dt),
        jax.ShapeDtypeStruct((Bp, 1), dt),
        jax.ShapeDtypeStruct((Bp, 1), dt),
        jax.ShapeDtypeStruct((Bp, HID), dt),
        jax.ShapeDtypeStruct((Bp, HID), dt),
        jax.ShapeDtypeStruct((Bp, HID), dt),
    )

    outs = pl.pallas_call(
        fnet6_5_kernel,
        out_shape=out_shape,
        grid_spec=pltpu.PrefetchScalarGridSpec(
            num_scalar_prefetch=0,
            grid=grid,
            in_specs=in_specs,
            out_specs=out_specs,
        ),
        compiler_params=pltpu.CompilerParams(
            dimension_semantics=("parallel",)),
    )(vx, ax, *prepared)

    if Bp != B:
        outs = tuple(o[:B] for o in outs)
    return outs


def reference(vx, ax, p, eps=1e-5):
    def bn(x, g, b, m, v):
        return g * (x - m) / jnp.sqrt(v + eps) + b

    vo1 = bn(jnp.maximum(vx @ p["w_fc1"].T + p["b_fc1"], 0.0),
             p["bn1_gamma"], p["bn1_beta"], p["bn1_mean"], p["bn1_var"])
    axn = bn(jnp.maximum(ax @ p["w_afc"].T + p["b_afc"], 0.0),
             p["bn2_gamma"], p["bn2_beta"], p["bn2_mean"], p["bn2_var"])
    cat = jnp.concatenate([vo1, axn], axis=-1)
    h = jnp.maximum(cat @ p["w_am1"].T + p["b_am1"], 0.0)
    att = h @ p["w_am2"].T + p["b_am2"]
    att_x = att + vo1

    def head(x):
        t = jnp.maximum(x @ p["w_attfc2"].T + p["b_attfc2"], 0.0)
        return t @ p["w_attfc3"].T + p["b_attfc3"]

    return head(att_x), head(vo1), head(axn), att_x, vo1, axn


if __name__ == "__main__":
    feature_dim = 512
    batch = 12   # deliberately not a multiple of 8 to exercise the padded tail

    key = jax.random.PRNGKey(0)
    keys = iter(jax.random.split(key, 22))

    def uniform(k, shape, bound):
        return jax.random.uniform(k, shape, minval=-bound, maxval=bound,
                                  dtype=jnp.float32)

    def linear(kw, kb, out_f, in_f):
        bound = 1.0 / in_f ** 0.5
        return uniform(kw, (out_f, in_f), bound), uniform(kb, (out_f,), bound)

    vx = jax.random.normal(next(keys), (batch, feature_dim), dtype=jnp.float32)
    ax = jax.random.normal(next(keys), (batch, HID), dtype=jnp.float32)

    w_fc1, b_fc1 = linear(next(keys), next(keys), HID, feature_dim)
    w_afc, b_afc = linear(next(keys), next(keys), HID, HID)
    w_am1, b_am1 = linear(next(keys), next(keys), HID, 2 * HID)   # AM fc1 (concat)
    w_am2, b_am2 = linear(next(keys), next(keys), HID, HID)       # AM fc2
    w_attfc2, b_attfc2 = linear(next(keys), next(keys), MID, HID)
    w_attfc3, b_attfc3 = linear(next(keys), next(keys), 1, MID)

    def bn_params(k1, k2, k3, k4, n):
        return dict(
            gamma=jax.random.uniform(k1, (n,), minval=0.5, maxval=1.5,
                                     dtype=jnp.float32),
            beta=uniform(k2, (n,), 0.1),
            mean=0.1 * jax.random.normal(k3, (n,), dtype=jnp.float32),
            var=jax.random.uniform(k4, (n,), minval=0.5, maxval=1.5,
                                   dtype=jnp.float32),
        )

    bn1 = bn_params(next(keys), next(keys), next(keys), next(keys), HID)
    bn2 = bn_params(next(keys), next(keys), next(keys), next(keys), HID)

    raw = dict(
        w_fc1=w_fc1, b_fc1=b_fc1,
        w_afc=w_afc, b_afc=b_afc,
        w_am1=w_am1, b_am1=b_am1,
        w_am2=w_am2, b_am2=b_am2,
        w_attfc2=w_attfc2, b_attfc2=b_attfc2,
        w_attfc3=w_attfc3, b_attfc3=b_attfc3,
        bn1_gamma=bn1["gamma"], bn1_beta=bn1["beta"],
        bn1_mean=bn1["mean"], bn1_var=bn1["var"],
        bn2_gamma=bn2["gamma"], bn2_beta=bn2["beta"],
        bn2_mean=bn2["mean"], bn2_var=bn2["var"],
    )

    prepared = prepare_params(raw)            # hoisted, one-time param prep
    outs = fnet6_5_forward(vx, ax, prepared)
    outs = jax.block_until_ready(outs)

    refs = reference(vx, ax, raw)
    names = ("att_out", "vout", "aout", "att_x", "vo1", "ax_norm")
    for name, o, r in zip(names, outs, refs):
        assert o.shape == r.shape, (name, o.shape, r.shape)
        assert jnp.allclose(o, r, atol=1e-4, rtol=1e-4), f"mismatch in {name}"

    print("KERNEL_OK")
</pallas_src>

<mosaic_0001>
module attributes {stable_mosaic.version = 11 : i64} {
  func.func @fnet6_5_kernel(%arg0: i32, %arg1: memref<16x512xf32, #tpu.memory_space<vmem>>, %arg2: memref<16x128xf32, #tpu.memory_space<vmem>>, %arg3: memref<512x128xf32, #tpu.memory_space<vmem>>, %arg4: memref<1x128xf32, #tpu.memory_space<vmem>>, %arg5: memref<1x128xf32, #tpu.memory_space<vmem>>, %arg6: memref<1x128xf32, #tpu.memory_space<vmem>>, %arg7: memref<128x128xf32, #tpu.memory_space<vmem>>, %arg8: memref<1x128xf32, #tpu.memory_space<vmem>>, %arg9: memref<1x128xf32, #tpu.memory_space<vmem>>, %arg10: memref<1x128xf32, #tpu.memory_space<vmem>>, %arg11: memref<256x128xf32, #tpu.memory_space<vmem>>, %arg12: memref<1x128xf32, #tpu.memory_space<vmem>>, %arg13: memref<128x128xf32, #tpu.memory_space<vmem>>, %arg14: memref<1x128xf32, #tpu.memory_space<vmem>>, %arg15: memref<128x64xf32, #tpu.memory_space<vmem>>, %arg16: memref<1x64xf32, #tpu.memory_space<vmem>>, %arg17: memref<1x64xf32, #tpu.memory_space<vmem>>, %arg18: memref<1x1xf32, #tpu.memory_space<vmem>>, %arg19: memref<16x1xf32, #tpu.memory_space<vmem>>, %arg20: memref<16x1xf32, #tpu.memory_space<vmem>>, %arg21: memref<16x1xf32, #tpu.memory_space<vmem>>, %arg22: memref<16x128xf32, #tpu.memory_space<vmem>>, %arg23: memref<16x128xf32, #tpu.memory_space<vmem>>, %arg24: memref<16x128xf32, #tpu.memory_space<vmem>>) attributes {dimension_semantics = [#tpu.dimension_semantics<parallel>], iteration_bounds = array<i64: 1>, scalar_prefetch = 0 : i64, scratch_operands = 0 : i64, tpu.core_type = #tpu.core_type<tc>, window_params = [{transform_indices = @transform_0, window_bounds = array<i64: 16, 512>}, {transform_indices = @transform_1, window_bounds = array<i64: 16, 128>}, {pipeline_mode = #tpu.pipeline_mode<synchronous>, transform_indices = @transform_2, window_bounds = array<i64: 512, 128>}, {pipeline_mode = #tpu.pipeline_mode<synchronous>, transform_indices = @transform_3, window_bounds = array<i64: 1, 128>}, {pipeline_mode = #tpu.pipeline_mode<synchronous>, transform_indices = @transform_4, window_bounds = array<i64: 1, 128>}, {pipeline_mode = #tpu.pipeline_mode<synchronous>, transform_indices = @transform_5, window_bounds = array<i64: 1, 128>}, {pipeline_mode = #tpu.pipeline_mode<synchronous>, transform_indices = @transform_6, window_bounds = array<i64: 128, 128>}, {pipeline_mode = #tpu.pipeline_mode<synchronous>, transform_indices = @transform_7, window_bounds = array<i64: 1, 128>}, {pipeline_mode = #tpu.pipeline_mode<synchronous>, transform_indices = @transform_8, window_bounds = array<i64: 1, 128>}, {pipeline_mode = #tpu.pipeline_mode<synchronous>, transform_indices = @transform_9, window_bounds = array<i64: 1, 128>}, {pipeline_mode = #tpu.pipeline_mode<synchronous>, transform_indices = @transform_10, window_bounds = array<i64: 256, 128>}, {pipeline_mode = #tpu.pipeline_mode<synchronous>, transform_indices = @transform_11, window_bounds = array<i64: 1, 128>}, {pipeline_mode = #tpu.pipeline_mode<synchronous>, transform_indices = @transform_12, window_bounds = array<i64: 128, 128>}, {pipeline_mode = #tpu.pipeline_mode<synchronous>, transform_indices = @transform_13, window_bounds = array<i64: 1, 128>}, {pipeline_mode = #tpu.pipeline_mode<synchronous>, transform_indices = @transform_14, window_bounds = array<i64: 128, 64>}, {pipeline_mode = #tpu.pipeline_mode<synchronous>, transform_indices = @transform_15, window_bounds = array<i64: 1, 64>}, {pipeline_mode = #tpu.pipeline_mode<synchronous>, transform_indices = @transform_16, window_bounds = array<i64: 1, 64>}, {pipeline_mode = #tpu.pipeline_mode<synchronous>, transform_indices = @transform_17, window_bounds = array<i64: 1, 1>}, {transform_indices = @transform_18, window_bounds = array<i64: 16, 1>}, {transform_indices = @transform_19, window_bounds = array<i64: 16, 1>}, {transform_indices = @transform_20, window_bounds = array<i64: 16, 1>}, {transform_indices = @transform_21, window_bounds = array<i64: 16, 128>}, {transform_indices = @transform_22, window_bounds = array<i64: 16, 128>}, {transform_indices = @transform_23, window_bounds = array<i64: 16, 128>}]} {
    %c0 = arith.constant 0 : index
    %c0_0 = arith.constant 0 : index
    %0 = vector.load %arg1[%c0, %c0_0] : memref<16x512xf32, #tpu.memory_space<vmem>>, vector<16x512xf32>
    %c0_1 = arith.constant 0 : index
    %c0_2 = arith.constant 0 : index
    %1 = vector.load %arg3[%c0_1, %c0_2] : memref<512x128xf32, #tpu.memory_space<vmem>>, vector<512x128xf32>
    %cst = arith.constant dense<0.000000e+00> : vector<16x128xf32>
    %2 = tpu.matmul %0, %1, %cst {dimension_numbers = #tpu.dot_dimension_numbers<[1], [0], [0], [1], [0, 0, 1, 1], [], []>} : vector<16x512xf32>, vector<512x128xf32>, vector<16x128xf32> -> vector<16x128xf32>
    %c0_3 = arith.constant 0 : index
    %c0_4 = arith.constant 0 : index
    %3 = vector.load %arg4[%c0_3, %c0_4] : memref<1x128xf32, #tpu.memory_space<vmem>>, vector<1x128xf32>
    %4 = vector.broadcast %3 : vector<1x128xf32> to vector<16x128xf32>
    %5 = arith.addf %2, %4 : vector<16x128xf32>
    %cst_5 = arith.constant 0.000000e+00 : f32
    %6 = vector.broadcast %cst_5 : f32 to vector<16x128xf32>
    %7 = arith.maximumf %5, %6 : vector<16x128xf32>
    %c0_6 = arith.constant 0 : index
    %c0_7 = arith.constant 0 : index
    %8 = vector.load %arg5[%c0_6, %c0_7] : memref<1x128xf32, #tpu.memory_space<vmem>>, vector<1x128xf32>
    %9 = vector.broadcast %8 : vector<1x128xf32> to vector<16x128xf32>
    %10 = arith.mulf %7, %9 : vector<16x128xf32>
    %c0_8 = arith.constant 0 : index
    %c0_9 = arith.constant 0 : index
    %11 = vector.load %arg6[%c0_8, %c0_9] : memref<1x128xf32, #tpu.memory_space<vmem>>, vector<1x128xf32>
    %12 = vector.broadcast %11 : vector<1x128xf32> to vector<16x128xf32>
    %13 = arith.addf %10, %12 : vector<16x128xf32>
    %c0_10 = arith.constant 0 : index
    %c0_11 = arith.constant 0 : index
    %14 = vector.load %arg2[%c0_10, %c0_11] : memref<16x128xf32, #tpu.memory_space<vmem>>, vector<16x128xf32>
    %c0_12 = arith.constant 0 : index
    %c0_13 = arith.constant 0 : index
    %15 = vector.load %arg7[%c0_12, %c0_13] : memref<128x128xf32, #tpu.memory_space<vmem>>, vector<128x128xf32>
    %cst_14 = arith.constant dense<0.000000e+00> : vector<16x128xf32>
    %16 = tpu.matmul %14, %15, %cst_14 {dimension_numbers = #tpu.dot_dimension_numbers<[1], [0], [0], [1], [0, 0, 1, 1], [], []>} : vector<16x128xf32>, vector<128x128xf32>, vector<16x128xf32> -> vector<16x128xf32>
    %c0_15 = arith.constant 0 : index
    %c0_16 = arith.constant 0 : index
    %17 = vector.load %arg8[%c0_15, %c0_16] : memref<1x128xf32, #tpu.memory_space<vmem>>, vector<1x128xf32>
    %18 = vector.broadcast %17 : vector<1x128xf32> to vector<16x128xf32>
    %19 = arith.addf %16, %18 : vector<16x128xf32>
    %cst_17 = arith.constant 0.000000e+00 : f32
    %20 = vector.broadcast %cst_17 : f32 to vector<16x128xf32>
    %21 = arith.maximumf %19, %20 : vector<16x128xf32>
    %c0_18 = arith.constant 0 : index
    %c0_19 = arith.constant 0 : index
    %22 = vector.load %arg9[%c0_18, %c0_19] : memref<1x128xf32, #tpu.memory_space<vmem>>, vector<1x128xf32>
    %23 = vector.broadcast %22 : vector<1x128xf32> to vector<16x128xf32>
    %24 = arith.mulf %21, %23 : vector<16x128xf32>
    %c0_20 = arith.constant 0 : index
    %c0_21 = arith.constant 0 : index
    %25 = vector.load %arg10[%c0_20, %c0_21] : memref<1x128xf32, #tpu.memory_space<vmem>>, vector<1x128xf32>
    %26 = vector.broadcast %25 : vector<1x128xf32> to vector<16x128xf32>
    %27 = arith.addf %24, %26 : vector<16x128xf32>
    %28 = tpu.concatenate %13, %27 in 1 : vector<16x128xf32>, vector<16x128xf32> -> vector<16x256xf32>
    %c0_22 = arith.constant 0 : index
    %c0_23 = arith.constant 0 : index
    %29 = vector.load %arg11[%c0_22, %c0_23] : memref<256x128xf32, #tpu.memory_space<vmem>>, vector<256x128xf32>
    %cst_24 = arith.constant dense<0.000000e+00> : vector<16x128xf32>
    %30 = tpu.matmul %28, %29, %cst_24 {dimension_numbers = #tpu.dot_dimension_numbers<[1], [0], [0], [1], [0, 0, 1, 1], [], []>} : vector<16x256xf32>, vector<256x128xf32>, vector<16x128xf32> -> vector<16x128xf32>
    %c0_25 = arith.constant 0 : index
    %c0_26 = arith.constant 0 : index
    %31 = vector.load %arg12[%c0_25, %c0_26] : memref<1x128xf32, #tpu.memory_space<vmem>>, vector<1x128xf32>
    %32 = vector.broadcast %31 : vector<1x128xf32> to vector<16x128xf32>
    %33 = arith.addf %30, %32 : vector<16x128xf32>
    %cst_27 = arith.constant 0.000000e+00 : f32
    %34 = vector.broadcast %cst_27 : f32 to vector<16x128xf32>
    %35 = arith.maximumf %33, %34 : vector<16x128xf32>
    %c0_28 = arith.constant 0 : index
    %c0_29 = arith.constant 0 : index
    %36 = vector.load %arg13[%c0_28, %c0_29] : memref<128x128xf32, #tpu.memory_space<vmem>>, vector<128x128xf32>
    %cst_30 = arith.constant dense<0.000000e+00> : vector<16x128xf32>
    %37 = tpu.matmul %35, %36, %cst_30 {dimension_numbers = #tpu.dot_dimension_numbers<[1], [0], [0], [1], [0, 0, 1, 1], [], []>} : vector<16x128xf32>, vector<128x128xf32>, vector<16x128xf32> -> vector<16x128xf32>
    %c0_31 = arith.constant 0 : index
    %c0_32 = arith.constant 0 : index
    %38 = vector.load %arg14[%c0_31, %c0_32] : memref<1x128xf32, #tpu.memory_space<vmem>>, vector<1x128xf32>
    %39 = vector.broadcast %38 : vector<1x128xf32> to vector<16x128xf32>
    %40 = arith.addf %37, %39 : vector<16x128xf32>
    %41 = arith.addf %40, %13 : vector<16x128xf32>
    %c0_33 = arith.constant 0 : index
    %c0_34 = arith.constant 0 : index
    %42 = vector.load %arg15[%c0_33, %c0_34] : memref<128x64xf32, #tpu.memory_space<vmem>>, vector<128x64xf32>
    %c0_35 = arith.constant 0 : index
    %c0_36 = arith.constant 0 : index
    %43 = vector.load %arg16[%c0_35, %c0_36] : memref<1x64xf32, #tpu.memory_space<vmem>>, vector<1x64xf32>
    %c0_37 = arith.constant 0 : index
    %c0_38 = arith.constant 0 : index
    %44 = vector.load %arg17[%c0_37, %c0_38] : memref<1x64xf32, #tpu.memory_space<vmem>>, vector<1x64xf32>
    %c0_39 = arith.constant 0 : index
    %c0_40 = arith.constant 0 : index
    %45 = vector.load %arg18[%c0_39, %c0_40] : memref<1x1xf32, #tpu.memory_space<vmem>>, vector<1x1xf32>
    %cst_41 = arith.constant dense<0.000000e+00> : vector<16x64xf32>
    %46 = tpu.matmul %41, %42, %cst_41 {dimension_numbers = #tpu.dot_dimension_numbers<[1], [0], [0], [1], [0, 0, 1, 1], [], []>} : vector<16x128xf32>, vector<128x64xf32>, vector<16x64xf32> -> vector<16x64xf32>
    %47 = vector.broadcast %43 : vector<1x64xf32> to vector<16x64xf32>
    %48 = arith.addf %46, %47 : vector<16x64xf32>
    %cst_42 = arith.constant 0.000000e+00 : f32
    %49 = vector.broadcast %cst_42 : f32 to vector<16x64xf32>
    %50 = arith.maximumf %48, %49 : vector<16x64xf32>
    %51 = vector.broadcast %44 : vector<1x64xf32> to vector<16x64xf32>
    %52 = arith.mulf %50, %51 : vector<16x64xf32>
    %cst_43 = arith.constant dense<0.000000e+00> : vector<16xf32>
    %53 = vector.multi_reduction <add>, %52, %cst_43 [1] : vector<16x64xf32> to vector<16xf32>
    %54 = vector.shape_cast %53 : vector<16xf32> to vector<16x1xf32>
    %55 = vector.broadcast %45 : vector<1x1xf32> to vector<16x1xf32>
    %56 = arith.addf %54, %55 : vector<16x1xf32>
    %c0_44 = arith.constant 0 : index
    %c0_45 = arith.constant 0 : index
    %57 = vector.load %arg19[%c0_44, %c0_45] : memref<16x1xf32, #tpu.memory_space<vmem>>, vector<16x1xf32>
    tpu.vector_store %arg19[%c0_44, %c0_45], %56 {strides = array<i32>} : memref<16x1xf32, #tpu.memory_space<vmem>>, vector<16x1xf32>,
    %cst_46 = arith.constant dense<0.000000e+00> : vector<16x64xf32>
    %58 = tpu.matmul %13, %42, %cst_46 {dimension_numbers = #tpu.dot_dimension_numbers<[1], [0], [0], [1], [0, 0, 1, 1], [], []>} : vector<16x128xf32>, vector<128x64xf32>, vector<16x64xf32> -> vector<16x64xf32>
    %59 = vector.broadcast %43 : vector<1x64xf32> to vector<16x64xf32>
    %60 = arith.addf %58, %59 : vector<16x64xf32>
    %cst_47 = arith.constant 0.000000e+00 : f32
    %61 = vector.broadcast %cst_47 : f32 to vector<16x64xf32>
    %62 = arith.maximumf %60, %61 : vector<16x64xf32>
    %63 = vector.broadcast %44 : vector<1x64xf32> to vector<16x64xf32>
    %64 = arith.mulf %62, %63 : vector<16x64xf32>
    %cst_48 = arith.constant dense<0.000000e+00> : vector<16xf32>
    %65 = vector.multi_reduction <add>, %64, %cst_48 [1] : vector<16x64xf32> to vector<16xf32>
    %66 = vector.shape_cast %65 : vector<16xf32> to vector<16x1xf32>
    %67 = vector.broadcast %45 : vector<1x1xf32> to vector<16x1xf32>
    %68 = arith.addf %66, %67 : vector<16x1xf32>
    %c0_49 = arith.constant 0 : index
    %c0_50 = arith.constant 0 : index
    %69 = vector.load %arg20[%c0_49, %c0_50] : memref<16x1xf32, #tpu.memory_space<vmem>>, vector<16x1xf32>
    tpu.vector_store %arg20[%c0_49, %c0_50], %68 {strides = array<i32>} : memref<16x1xf32, #tpu.memory_space<vmem>>, vector<16x1xf32>,
    %cst_51 = arith.constant dense<0.000000e+00> : vector<16x64xf32>
    %70 = tpu.matmul %27, %42, %cst_51 {dimension_numbers = #tpu.dot_dimension_numbers<[1], [0], [0], [1], [0, 0, 1, 1], [], []>} : vector<16x128xf32>, vector<128x64xf32>, vector<16x64xf32> -> vector<16x64xf32>
    %71 = vector.broadcast %43 : vector<1x64xf32> to vector<16x64xf32>
    %72 = arith.addf %70, %71 : vector<16x64xf32>
    %cst_52 = arith.constant 0.000000e+00 : f32
    %73 = vector.broadcast %cst_52 : f32 to vector<16x64xf32>
    %74 = arith.maximumf %72, %73 : vector<16x64xf32>
    %75 = vector.broadcast %44 : vector<1x64xf32> to vector<16x64xf32>
    %76 = arith.mulf %74, %75 : vector<16x64xf32>
    %cst_53 = arith.constant dense<0.000000e+00> : vector<16xf32>
    %77 = vector.multi_reduction <add>, %76, %cst_53 [1] : vector<16x64xf32> to vector<16xf32>
    %78 = vector.shape_cast %77 : vector<16xf32> to vector<16x1xf32>
    %79 = vector.broadcast %45 : vector<1x1xf32> to vector<16x1xf32>
    %80 = arith.addf %78, %79 : vector<16x1xf32>
    %c0_54 = arith.constant 0 : index
    %c0_55 = arith.constant 0 : index
    %81 = vector.load %arg21[%c0_54, %c0_55] : memref<16x1xf32, #tpu.memory_space<vmem>>, vector<16x1xf32>
    tpu.vector_store %arg21[%c0_54, %c0_55], %80 {strides = array<i32>} : memref<16x1xf32, #tpu.memory_space<vmem>>, vector<16x1xf32>,
    %c0_56 = arith.constant 0 : index
    %c0_57 = arith.constant 0 : index
    %82 = vector.load %arg22[%c0_56, %c0_57] : memref<16x128xf32, #tpu.memory_space<vmem>>, vector<16x128xf32>
    tpu.vector_store %arg22[%c0_56, %c0_57], %41 {strides = array<i32>} : memref<16x128xf32, #tpu.memory_space<vmem>>, vector<16x128xf32>,
    %c0_58 = arith.constant 0 : index
    %c0_59 = arith.constant 0 : index
    %83 = vector.load %arg23[%c0_58, %c0_59] : memref<16x128xf32, #tpu.memory_space<vmem>>, vector<16x128xf32>
    tpu.vector_store %arg23[%c0_58, %c0_59], %13 {strides = array<i32>} : memref<16x128xf32, #tpu.memory_space<vmem>>, vector<16x128xf32>,
    %c0_60 = arith.constant 0 : index
    %c0_61 = arith.constant 0 : index
    %84 = vector.load %arg24[%c0_60, %c0_61] : memref<16x128xf32, #tpu.memory_space<vmem>>, vector<16x128xf32>
    tpu.vector_store %arg24[%c0_60, %c0_61], %27 {strides = array<i32>} : memref<16x128xf32, #tpu.memory_space<vmem>>, vector<16x128xf32>,
    return
  }
  func.func @transform_0(%arg0: i32) -> (i32, i32) {
    %c0_i32 = arith.constant 0 : i32
    %c0_i32_0 = arith.constant 0 : i32
    return %arg0, %c0_i32 : i32, i32
  }
  func.func @transform_1(%arg0: i32) -> (i32, i32) {
    %c0_i32 = arith.constant 0 : i32
    %c0_i32_0 = arith.constant 0 : i32
    return %arg0, %c0_i32 : i32, i32
  }
  func.func @transform_2(%arg0: i32) -> (i32, i32) {
    %c0_i32 = arith.constant 0 : i32
    %c0_i32_0 = arith.constant 0 : i32
    %c0_i32_1 = arith.constant 0 : i32
    return %c0_i32, %c0_i32_0 : i32, i32
  }
  func.func @transform_3(%arg0: i32) -> (i32, i32) {
    %c0_i32 = arith.constant 0 : i32
    %c0_i32_0 = arith.constant 0 : i32
    %c0_i32_1 = arith.constant 0 : i32
    return %c0_i32, %c0_i32_0 : i32, i32
  }
  func.func @transform_4(%arg0: i32) -> (i32, i32) {
    %c0_i32 = arith.constant 0 : i32
    %c0_i32_0 = arith.constant 0 : i32
    %c0_i32_1 = arith.constant 0 : i32
    return %c0_i32, %c0_i32_0 : i32, i32
  }
  func.func @transform_5(%arg0: i32) -> (i32, i32) {
    %c0_i32 = arith.constant 0 : i32
    %c0_i32_0 = arith.constant 0 : i32
    %c0_i32_1 = arith.constant 0 : i32
    return %c0_i32, %c0_i32_0 : i32, i32
  }
  func.func @transform_6(%arg0: i32) -> (i32, i32) {
    %c0_i32 = arith.constant 0 : i32
    %c0_i32_0 = arith.constant 0 : i32
    %c0_i32_1 = arith.constant 0 : i32
    return %c0_i32, %c0_i32_0 : i32, i32
  }
  func.func @transform_7(%arg0: i32) -> (i32, i32) {
    %c0_i32 = arith.constant 0 : i32
    %c0_i32_0 = arith.constant 0 : i32
    %c0_i32_1 = arith.constant 0 : i32
    return %c0_i32, %c0_i32_0 : i32, i32
  }
  func.func @transform_8(%arg0: i32) -> (i32, i32) {
    %c0_i32 = arith.constant 0 : i32
    %c0_i32_0 = arith.constant 0 : i32
    %c0_i32_1 = arith.constant 0 : i32
    return %c0_i32, %c0_i32_0 : i32, i32
  }
  func.func @transform_9(%arg0: i32) -> (i32, i32) {
    %c0_i32 = arith.constant 0 : i32
    %c0_i32_0 = arith.constant 0 : i32
    %c0_i32_1 = arith.constant 0 : i32
    return %c0_i32, %c0_i32_0 : i32, i32
  }
  func.func @transform_10(%arg0: i32) -> (i32, i32) {
    %c0_i32 = arith.constant 0 : i32
    %c0_i32_0 = arith.constant 0 : i32
    %c0_i32_1 = arith.constant 0 : i32
    return %c0_i32, %c0_i32_0 : i32, i32
  }
  func.func @transform_11(%arg0: i32) -> (i32, i32) {
    %c0_i32 = arith.constant 0 : i32
    %c0_i32_0 = arith.constant 0 : i32
    %c0_i32_1 = arith.constant 0 : i32
    return %c0_i32, %c0_i32_0 : i32, i32
  }
  func.func @transform_12(%arg0: i32) -> (i32, i32) {
    %c0_i32 = arith.constant 0 : i32
    %c0_i32_0 = arith.constant 0 : i32
    %c0_i32_1 = arith.constant 0 : i32
    return %c0_i32, %c0_i32_0 : i32, i32
  }
  func.func @transform_13(%arg0: i32) -> (i32, i32) {
    %c0_i32 = arith.constant 0 : i32
    %c0_i32_0 = arith.constant 0 : i32
    %c0_i32_1 = arith.constant 0 : i32
    return %c0_i32, %c0_i32_0 : i32, i32
  }
  func.func @transform_14(%arg0: i32) -> (i32, i32) {
    %c0_i32 = arith.constant 0 : i32
    %c0_i32_0 = arith.constant 0 : i32
    %c0_i32_1 = arith.constant 0 : i32
    return %c0_i32, %c0_i32_0 : i32, i32
  }
  func.func @transform_15(%arg0: i32) -> (i32, i32) {
    %c0_i32 = arith.constant 0 : i32
    %c0_i32_0 = arith.constant 0 : i32
    %c0_i32_1 = arith.constant 0 : i32
    return %c0_i32, %c0_i32_0 : i32, i32
  }
  func.func @transform_16(%arg0: i32) -> (i32, i32) {
    %c0_i32 = arith.constant 0 : i32
    %c0_i32_0 = arith.constant 0 : i32
    %c0_i32_1 = arith.constant 0 : i32
    return %c0_i32, %c0_i32_0 : i32, i32
  }
  func.func @transform_17(%arg0: i32) -> (i32, i32) {
    %c0_i32 = arith.constant 0 : i32
    %c0_i32_0 = arith.constant 0 : i32
    %c0_i32_1 = arith.constant 0 : i32
    return %c0_i32, %c0_i32_0 : i32, i32
  }
  func.func @transform_18(%arg0: i32) -> (i32, i32) {
    %c0_i32 = arith.constant 0 : i32
    %c0_i32_0 = arith.constant 0 : i32
    return %arg0, %c0_i32 : i32, i32
  }
  func.func @transform_19(%arg0: i32) -> (i32, i32) {
    %c0_i32 = arith.constant 0 : i32
    %c0_i32_0 = arith.constant 0 : i32
    return %arg0, %c0_i32 : i32, i32
  }
  func.func @transform_20(%arg0: i32) -> (i32, i32) {
    %c0_i32 = arith.constant 0 : i32
    %c0_i32_0 = arith.constant 0 : i32
    return %arg0, %c0_i32 : i32, i32
  }
  func.func @transform_21(%arg0: i32) -> (i32, i32) {
    %c0_i32 = arith.constant 0 : i32
    %c0_i32_0 = arith.constant 0 : i32
    return %arg0, %c0_i32 : i32, i32
  }
  func.func @transform_22(%arg0: i32) -> (i32, i32) {
    %c0_i32 = arith.constant 0 : i32
    %c0_i32_0 = arith.constant 0 : i32
    return %arg0, %c0_i32 : i32, i32
  }
  func.func @transform_23(%arg0: i32) -> (i32, i32) {
    %c0_i32 = arith.constant 0 : i32
    %c0_i32_0 = arith.constant 0 : i32
    return %arg0, %c0_i32 : i32, i32
  }
}

</mosaic_0001>

<llo_original>
// kernel: tpu_custom_call.1
$region0: #{tpu_custom_call.1}
  #allocation0 [shape = 'u32[]', space=smem, size = 0x4, offset = 0x4, fixed_abs, tag = 'smem constant byte address 0x4 - core index']
  #allocation1 [shape = 'u32[144,128]{1,0:T(1,128)}', space=vmem, size = 0x12000, scoped, tag = 'internal scratch']
  #allocation2 [shape = 'f32[1,1]{1,0:T(1,128)S(1)}', space=vmem, size = 0x200, scoped, tag = 'scoped memory for tpu_custom_call.1']
  %s0 = inlined_call_operand.vmem [shape: f32[16,512], index: 0, kind: input, shape index: {}]
  %s1 = inlined_call_operand.vmem [shape: f32[16,128], index: 1, kind: input, shape index: {}]
  %s2 = inlined_call_operand.hbm [shape: f32[512,128], index: 2, kind: input, shape index: {}]
  %s3 = inlined_call_operand.vmem [shape: f32[1,128], index: 3, kind: input, shape index: {}]
  %s4 = inlined_call_operand.vmem [shape: f32[1,128], index: 4, kind: input, shape index: {}]
  %s5 = inlined_call_operand.vmem [shape: f32[1,128], index: 5, kind: input, shape index: {}]
  %s6 = inlined_call_operand.vmem [shape: f32[128,128], index: 6, kind: input, shape index: {}]
  %s7 = inlined_call_operand.vmem [shape: f32[1,128], index: 7, kind: input, shape index: {}]
  %s8 = inlined_call_operand.vmem [shape: f32[1,128], index: 8, kind: input, shape index: {}]
  %s9 = inlined_call_operand.vmem [shape: f32[1,128], index: 9, kind: input, shape index: {}]
  %s10 = inlined_call_operand.hbm [shape: f32[256,128], index: 10, kind: input, shape index: {}]
  %s11 = inlined_call_operand.vmem [shape: f32[1,128], index: 11, kind: input, shape index: {}]
  %s12 = inlined_call_operand.hbm [shape: f32[128,128], index: 12, kind: input, shape index: {}]
  %s13 = inlined_call_operand.vmem [shape: f32[1,128], index: 13, kind: input, shape index: {}]
  %s14 = inlined_call_operand.vmem [shape: f32[128,64], index: 14, kind: input, shape index: {}]
  %s15 = inlined_call_operand.vmem [shape: f32[1,64], index: 15, kind: input, shape index: {}]
  %s16 = inlined_call_operand.vmem [shape: f32[1,64], index: 16, kind: input, shape index: {}]
  %s17 = inlined_call_operand.<no memory space> [shape: f32[1,1], index: 17, kind: input, shape index: {}]
  %s18 = inlined_call_operand.vmem [shape: f32[16,1], index: 18, kind: output, shape index: {0}]
  %s19 = inlined_call_operand.vmem [shape: f32[16,1], index: 19, kind: output, shape index: {1}]
  %s20 = inlined_call_operand.vmem [shape: f32[16,1], index: 20, kind: output, shape index: {2}]
  %s21 = inlined_call_operand.hbm [shape: f32[16,128], index: 21, kind: output, shape index: {3}]
  %s22 = inlined_call_operand.hbm [shape: f32[16,128], index: 22, kind: output, shape index: {4}]
  %s23 = inlined_call_operand.hbm [shape: f32[16,128], index: 23, kind: output, shape index: {5}]
  %24 = xla_tuple %s18, %s19, %s20, %s21, %s22, %s23
  %s25 = sld [smem:[#allocation0]]
  $region134: #{tpu_custom_call.1} parent=0
    _
  %s27 = ssub.s32 1, %s25
  %s28 = scalar_select 0, %s27, %s25
  %v29 = vstv %s17
  %30 = vst [vmem:[#allocation2] sm:$0x1] %v29
  $region1: #{tpu_custom_call.1} parent=0
    #allocation3 [shape = 'u8[262144]{0}', space=vmem, size = 0x40000, scoped, tag = 'input window, operand 2, single buffered']
    #allocation4 [shape = 's32[1]{0}', space=sflag, size = 0x4, scoped, tag = 'scoped memory for tpu_custom_call.1']
    #allocation5 [shape = 's32[1]{0}', space=sflag, size = 0x4, scoped, tag = 'scoped memory for tpu_custom_call.1']
    #allocation6 [shape = 'u8[131072]{0}', space=vmem, size = 0x20000, scoped, tag = 'input window, operand 10, single buffered']
    #allocation7 [shape = 's32[1]{0}', space=sflag, size = 0x4, scoped, tag = 'scoped memory for tpu_custom_call.1']
    #allocation8 [shape = 'u8[65536]{0}', space=vmem, size = 0x10000, scoped, tag = 'input window, operand 12, single buffered']
    #allocation9 [shape = 'u8[8192]{0}', space=vmem, size = 0x2000, scoped, tag = 'output window, operand 3, single buffered']
    #allocation10 [shape = 'u8[8192]{0}', space=vmem, size = 0x2000, scoped, tag = 'output window, operand 4, single buffered']
    #allocation11 [shape = 's32[1]{0}', space=sflag, size = 0x4, scoped, tag = 'scoped memory for tpu_custom_call.1']
    #allocation12 [shape = 'u8[8192]{0}', space=vmem, size = 0x2000, scoped, tag = 'output window, operand 5, single buffered']
    %31 = vsyncpa [#allocation4], 0
    %32 = vsyncpa [#allocation7], 0
    %33 = vsyncpa [#allocation5], 0
    %34 = vsyncpa [#allocation11], 0
    // Predicated region
    $region2: #{tpu_custom_call.1} parent=1 // pred_check
      _
    $region3: #{tpu_custom_call.1} parent=1 // pred_check_branch
      %36 = sbr.rel (0) target = $region5
    $region4: #{tpu_custom_call.1} parent=1 // pred_region
      _
    $region5: #{tpu_custom_call.1} parent=1 // pred_fallthru
      _
    // Predicated region
    $region6: #{tpu_custom_call.1} parent=1 // pred_check
      _
    $region7: #{tpu_custom_call.1} parent=1 // pred_check_branch
      %38 = sbr.rel (0) target = $region9
    $region8: #{tpu_custom_call.1} parent=1 // pred_region
      _
    $region9: #{tpu_custom_call.1} parent=1 // pred_fallthru
      _
    // Predicated region
    $region10: #{tpu_custom_call.1} parent=1 // pred_check
      _
    $region11: #{tpu_custom_call.1} parent=1 // pred_check_branch
      %40 = sbr.rel (0) target = $region13
    $region12: #{tpu_custom_call.1} parent=1 // pred_region
      %s42 = ssub.s32 8192, 8192
      %43 = vsyncadd [#allocation4], %s42
      %s44 = sshll.u32 [#allocation3], 4
      %s45 = int_to_ptr.vmem [resolvable:$true] %s44
      %50 = dma.hbm_to_vmem [thread:$0]  %s2, 8192, %s45, [#allocation4], 128, 128, 8
    $region13: #{tpu_custom_call.1} parent=1 // pred_fallthru
      _
    // Predicated region
    $region14: #{tpu_custom_call.1} parent=1 // pred_check
      _
    $region15: #{tpu_custom_call.1} parent=1 // pred_check_branch
      %52 = sbr.rel (0) target = $region17
    $region16: #{tpu_custom_call.1} parent=1 // pred_region
      _
    $region17: #{tpu_custom_call.1} parent=1 // pred_fallthru
      _
    // Predicated region
    $region18: #{tpu_custom_call.1} parent=1 // pred_check
      _
    $region19: #{tpu_custom_call.1} parent=1 // pred_check_branch
      %54 = sbr.rel (0) target = $region21
    $region20: #{tpu_custom_call.1} parent=1 // pred_region
      _
    $region21: #{tpu_custom_call.1} parent=1 // pred_fallthru
      _
    // Predicated region
    $region22: #{tpu_custom_call.1} parent=1 // pred_check
      _
    $region23: #{tpu_custom_call.1} parent=1 // pred_check_branch
      %56 = sbr.rel (0) target = $region25
    $region24: #{tpu_custom_call.1} parent=1 // pred_region
      _
    $region25: #{tpu_custom_call.1} parent=1 // pred_fallthru
      _
    // Predicated region
    $region26: #{tpu_custom_call.1} parent=1 // pred_check
      _
    $region27: #{tpu_custom_call.1} parent=1 // pred_check_branch
      %58 = sbr.rel (0) target = $region29
    $region28: #{tpu_custom_call.1} parent=1 // pred_region
      _
    $region29: #{tpu_custom_call.1} parent=1 // pred_fallthru
      _
    // Predicated region
    $region30: #{tpu_custom_call.1} parent=1 // pred_check
      _
    $region31: #{tpu_custom_call.1} parent=1 // pred_check_branch
      %60 = sbr.rel (0) target = $region33
    $region32: #{tpu_custom_call.1} parent=1 // pred_region
      _
    $region33: #{tpu_custom_call.1} parent=1 // pred_fallthru
      _
    // Predicated region
    $region34: #{tpu_custom_call.1} parent=1 // pred_check
      _
    $region35: #{tpu_custom_call.1} parent=1 // pred_check_branch
      %62 = sbr.rel (0) target = $region37
    $region36: #{tpu_custom_call.1} parent=1 // pred_region
      _
    $region37: #{tpu_custom_call.1} parent=1 // pred_fallthru
      _
    // Predicated region
    $region38: #{tpu_custom_call.1} parent=1 // pred_check
      _
    $region39: #{tpu_custom_call.1} parent=1 // pred_check_branch
      %64 = sbr.rel (0) target = $region41
    $region40: #{tpu_custom_call.1} parent=1 // pred_region
      _
    $region41: #{tpu_custom_call.1} parent=1 // pred_fallthru
      _
    // Predicated region
    $region42: #{tpu_custom_call.1} parent=1 // pred_check
      _
    $region43: #{tpu_custom_call.1} parent=1 // pred_check_branch
      %66 = sbr.rel (0) target = $region45
    $region44: #{tpu_custom_call.1} parent=1 // pred_region
      %s68 = ssub.s32 4096, 4096
      %69 = vsyncadd [#allocation7], %s68
      %s70 = sshll.u32 [#allocation6], 4
      %s71 = int_to_ptr.vmem [resolvable:$true] %s70
      %76 = dma.hbm_to_vmem [thread:$0]  %s10, 4096, %s71, [#allocation7], 128, 128, 8
    $region45: #{tpu_custom_call.1} parent=1 // pred_fallthru
      _
    // Predicated region
    $region46: #{tpu_custom_call.1} parent=1 // pred_check
      _
    $region47: #{tpu_custom_call.1} parent=1 // pred_check_branch
      %78 = sbr.rel (0) target = $region49
    $region48: #{tpu_custom_call.1} parent=1 // pred_region
      _
    $region49: #{tpu_custom_call.1} parent=1 // pred_fallthru
      _
    // Predicated region
    $region50: #{tpu_custom_call.1} parent=1 // pred_check
      _
    $region51: #{tpu_custom_call.1} parent=1 // pred_check_branch
      %80 = sbr.rel (0) target = $region53
    $region52: #{tpu_custom_call.1} parent=1 // pred_region
      %s82 = ssub.s32 2048, 2048
      %83 = vsyncadd [#allocation7], %s82
      %s84 = sshll.u32 [#allocation8], 4
      %s85 = int_to_ptr.vmem [resolvable:$true] %s84
      %90 = dma.hbm_to_vmem [thread:$0]  %s12, 2048, %s85, [#allocation7], 128, 128, 8
    $region53: #{tpu_custom_call.1} parent=1 // pred_fallthru
      _
    // Predicated region
    $region54: #{tpu_custom_call.1} parent=1 // pred_check
      _
    $region55: #{tpu_custom_call.1} parent=1 // pred_check_branch
      %92 = sbr.rel (0) target = $region57
    $region56: #{tpu_custom_call.1} parent=1 // pred_region
      _
    $region57: #{tpu_custom_call.1} parent=1 // pred_fallthru
      _
    // Predicated region
    $region58: #{tpu_custom_call.1} parent=1 // pred_check
      _
    $region59: #{tpu_custom_call.1} parent=1 // pred_check_branch
      %94 = sbr.rel (0) target = $region61
    $region60: #{tpu_custom_call.1} parent=1 // pred_region
      _
    $region61: #{tpu_custom_call.1} parent=1 // pred_fallthru
      _
    // Predicated region
    $region62: #{tpu_custom_call.1} parent=1 // pred_check
      _
    $region63: #{tpu_custom_call.1} parent=1 // pred_check_branch
      %96 = sbr.rel (0) target = $region65
    $region64: #{tpu_custom_call.1} parent=1 // pred_region
      _
    $region65: #{tpu_custom_call.1} parent=1 // pred_fallthru
      _
    // Predicated region
    $region66: #{tpu_custom_call.1} parent=1 // pred_check
      _
    $region67: #{tpu_custom_call.1} parent=1 // pred_check_branch
      %98 = sbr.rel (0) target = $region69
    $region68: #{tpu_custom_call.1} parent=1 // pred_region
      _
    $region69: #{tpu_custom_call.1} parent=1 // pred_fallthru
      _
    // Predicated region
    $region70: #{tpu_custom_call.1} parent=1 // pred_check
      _
    $region71: #{tpu_custom_call.1} parent=1 // pred_check_branch
      %100 = sbr.rel (0) target = $region73
    $region72: #{tpu_custom_call.1} parent=1 // pred_region
      _
    $region73: #{tpu_custom_call.1} parent=1 // pred_fallthru
      _
    // Predicated region
    $region74: #{tpu_custom_call.1} parent=1 // pred_check
      _
    $region75: #{tpu_custom_call.1} parent=1 // pred_check_branch
      %102 = sbr.rel (0) target = $region77
    $region76: #{tpu_custom_call.1} parent=1 // pred_region
      %103 = dma.done [#allocation4], 8192
    $region77: #{tpu_custom_call.1} parent=1 // pred_fallthru
      _
    // Predicated region
    $region78: #{tpu_custom_call.1} parent=1 // pred_check
      _
    $region79: #{tpu_custom_call.1} parent=1 // pred_check_branch
      %105 = sbr.rel (0) target = $region81
    $region80: #{tpu_custom_call.1} parent=1 // pred_region
      %106 = dma.done [#allocation7], 4096
    $region81: #{tpu_custom_call.1} parent=1 // pred_fallthru
      _
    // Predicated region
    $region82: #{tpu_custom_call.1} parent=1 // pred_check
      _
    $region83: #{tpu_custom_call.1} parent=1 // pred_check_branch
      %108 = sbr.rel (0) target = $region85
    $region84: #{tpu_custom_call.1} parent=1 // pred_region
      %109 = dma.done [#allocation7], 2048
    $region85: #{tpu_custom_call.1} parent=1 // pred_fallthru
      _
    %v110 = vld [vmem:[%s0] sm:$0xff]
    %v111 = vld [vmem:[%s0 + $0x8] sm:$0xff]
    %v112 = vld [vmem:[%s0 + $0x10] sm:$0xff]
    %v113 = vld [vmem:[%s0 + $0x18] sm:$0xff]
    %v114 = vld [vmem:[%s0 + $0x20] sm:$0xff]
    %v115 = vld [vmem:[%s0 + $0x28] sm:$0xff]
    %v116 = vld [vmem:[%s0 + $0x30] sm:$0xff]
    %v117 = vld [vmem:[%s0 + $0x38] sm:$0xff]
    %v118 = vld [vmem:[#allocation3] sm:$0xff]
    %v119 = vld [vmem:[#allocation3 + $0x8] sm:$0xff]
    %v120 = vld [vmem:[#allocation3 + $0x10] sm:$0xff]
    %v121 = vld [vmem:[#allocation3 + $0x18] sm:$0xff]
    %v122 = vld [vmem:[#allocation3 + $0x20] sm:$0xff]
    %v123 = vld [vmem:[#allocation3 + $0x28] sm:$0xff]
    %v124 = vld [vmem:[#allocation3 + $0x30] sm:$0xff]
    %v125 = vld [vmem:[#allocation3 + $0x38] sm:$0xff]
    %v126 = vld [vmem:[#allocation3 + $0x40] sm:$0xff]
    %v127 = vld [vmem:[#allocation3 + $0x48] sm:$0xff]
    %v128 = vld [vmem:[#allocation3 + $0x50] sm:$0xff]
    %v129 = vld [vmem:[#allocation3 + $0x58] sm:$0xff]
    %v130 = vld [vmem:[#allocation3 + $0x60] sm:$0xff]
    %v131 = vld [vmem:[#allocation3 + $0x68] sm:$0xff]
    %v132 = vld [vmem:[#allocation3 + $0x70] sm:$0xff]
    %v133 = vld [vmem:[#allocation3 + $0x78] sm:$0xff]
    %v134 = vld [vmem:[#allocation3 + $0x80] sm:$0xff]
    %v135 = vld [vmem:[#allocation3 + $0x88] sm:$0xff]
    %v136 = vld [vmem:[#allocation3 + $0x90] sm:$0xff]
    %v137 = vld [vmem:[#allocation3 + $0x98] sm:$0xff]
    %v138 = vld [vmem:[#allocation3 + $0xa0] sm:$0xff]
    %v139 = vld [vmem:[#allocation3 + $0xa8] sm:$0xff]
    %v140 = vld [vmem:[#allocation3 + $0xb0] sm:$0xff]
    %v141 = vld [vmem:[#allocation3 + $0xb8] sm:$0xff]
    %v142 = vld [vmem:[#allocation3 + $0xc0] sm:$0xff]
    %v143 = vld [vmem:[#allocation3 + $0xc8] sm:$0xff]
    %v144 = vld [vmem:[#allocation3 + $0xd0] sm:$0xff]
    %v145 = vld [vmem:[#allocation3 + $0xd8] sm:$0xff]
    %v146 = vld [vmem:[#allocation3 + $0xe0] sm:$0xff]
    %v147 = vld [vmem:[#allocation3 + $0xe8] sm:$0xff]
    %v148 = vld [vmem:[#allocation3 + $0xf0] sm:$0xff]
    %v149 = vld [vmem:[#allocation3 + $0xf8] sm:$0xff]
    %v150 = vld [vmem:[#allocation3 + $0x100] sm:$0xff]
    %v151 = vld [vmem:[#allocation3 + $0x108] sm:$0xff]
    %v152 = vld [vmem:[#allocation3 + $0x110] sm:$0xff]
    %v153 = vld [vmem:[#allocation3 + $0x118] sm:$0xff]
    %v154 = vld [vmem:[#allocation3 + $0x120] sm:$0xff]
    %v155 = vld [vmem:[#allocation3 + $0x128] sm:$0xff]
    %v156 = vld [vmem:[#allocation3 + $0x130] sm:$0xff]
    %v157 = vld [vmem:[#allocation3 + $0x138] sm:$0xff]
    %v158 = vld [vmem:[#allocation3 + $0x140] sm:$0xff]
    %v159 = vld [vmem:[#allocation3 + $0x148] sm:$0xff]
    %v160 = vld [vmem:[#allocation3 + $0x150] sm:$0xff]
    %v161 = vld [vmem:[#allocation3 + $0x158] sm:$0xff]
    %v162 = vld [vmem:[#allocation3 + $0x160] sm:$0xff]
    %v163 = vld [vmem:[#allocation3 + $0x168] sm:$0xff]
    %v164 = vld [vmem:[#allocation3 + $0x170] sm:$0xff]
    %v165 = vld [vmem:[#allocation3 + $0x178] sm:$0xff]
    %v166 = vld [vmem:[#allocation3 + $0x180] sm:$0xff]
    %v167 = vld [vmem:[#allocation3 + $0x188] sm:$0xff]
    %v168 = vld [vmem:[#allocation3 + $0x190] sm:$0xff]
    %v169 = vld [vmem:[#allocation3 + $0x198] sm:$0xff]
    %v170 = vld [vmem:[#allocation3 + $0x1a0] sm:$0xff]
    %v171 = vld [vmem:[#allocation3 + $0x1a8] sm:$0xff]
    %v172 = vld [vmem:[#allocation3 + $0x1b0] sm:$0xff]
    %v173 = vld [vmem:[#allocation3 + $0x1b8] sm:$0xff]
    %v174 = vld [vmem:[#allocation3 + $0x1c0] sm:$0xff]
    %v175 = vld [vmem:[#allocation3 + $0x1c8] sm:$0xff]
    %v176 = vld [vmem:[#allocation3 + $0x1d0] sm:$0xff]
    %v177 = vld [vmem:[#allocation3 + $0x1d8] sm:$0xff]
    %v178 = vld [vmem:[#allocation3 + $0x1e0] sm:$0xff]
    %v179 = vld [vmem:[#allocation3 + $0x1e8] sm:$0xff]
    %v180 = vld [vmem:[#allocation3 + $0x1f0] sm:$0xff]
    %v181 = vld [vmem:[#allocation3 + $0x1f8] sm:$0xff]
    %v182 = vld [vmem:[%s3] sm:$0x1]
    %v184 = vlaneseq
    %v185 = vshrl.u32 %v184, 7
    %v186 = vsub.s32 0, %v185
    %v187 = vrot.slane %v182, %v186
    %189 = vmatprep.subr.mxu0 0.0
    %190 = vmatpush1.msra.mxu0 %v118
    %191 = vmatprep.subr.mxu0 0.0
    %192 = vmatpush1.msra.mxu0 %v119
    %193 = vmatprep.subr.mxu0 0.0
    %194 = vmatpush1.msra.mxu0 %v120
    %195 = vmatprep.subr.mxu0 0.0
    %196 = vmatpush1.msra.mxu0 %v121
    %197 = vmatprep.subr.mxu0 0.0
    %198 = vmatpush1.msra.mxu0 %v122
    %199 = vmatprep.subr.mxu0 0.0
    %200 = vmatpush1.msra.mxu0 %v123
    %201 = vmatprep.subr.mxu0 0.0
    %202 = vmatpush1.msra.mxu0 %v124
    %203 = vmatprep.subr.mxu0 0.0
    %204 = vmatpush1.msra.mxu0 %v125
    %205 = vmatprep.subr.mxu0 0.0
    %206 = vmatpush1.msra.mxu0 %v126
    %207 = vmatprep.subr.mxu0 0.0
    %208 = vmatpush1.msra.mxu0 %v127
    %209 = vmatprep.subr.mxu0 0.0
    %210 = vmatpush1.msra.mxu0 %v128
    %211 = vmatprep.subr.mxu0 0.0
    %212 = vmatpush1.msra.mxu0 %v129
    %213 = vmatprep.subr.mxu0 0.0
    %214 = vmatpush1.msra.mxu0 %v130
    %215 = vmatprep.subr.mxu0 0.0
    %216 = vmatpush1.msra.mxu0 %v131
    %217 = vmatprep.subr.mxu0 0.0
    %218 = vmatpush1.msra.mxu0 %v132
    %219 = vmatprep.subr.mxu0 0.0
    %220 = vmatpush1.msra.mxu0 %v133
    %221 = vmatprep.subr.mxu0 0.0
    %222 = vmatpush1.msra.mxu0 %v134
    %223 = vmatprep.subr.mxu0 0.0
    %224 = vmatpush1.msra.mxu0 %v135
    %225 = vmatprep.subr.mxu0 0.0
    %226 = vmatpush1.msra.mxu0 %v136
    %227 = vmatprep.subr.mxu0 0.0
    %228 = vmatpush1.msra.mxu0 %v137
    %229 = vmatprep.subr.mxu0 0.0
    %230 = vmatpush1.msra.mxu0 %v138
    %231 = vmatprep.subr.mxu0 0.0
    %232 = vmatpush1.msra.mxu0 %v139
    %233 = vmatprep.subr.mxu0 0.0
    %234 = vmatpush1.msra.mxu0 %v140
    %235 = vmatprep.subr.mxu0 0.0
    %236 = vmatpush1.msra.mxu0 %v141
    %237 = vmatprep.subr.mxu0 0.0
    %238 = vmatpush1.msra.mxu0 %v142
    %239 = vmatprep.subr.mxu0 0.0
    %240 = vmatpush1.msra.mxu0 %v143
    %241 = vmatprep.subr.mxu0 0.0
    %242 = vmatpush1.msra.mxu0 %v144
    %243 = vmatprep.subr.mxu0 0.0
    %244 = vmatpush1.msra.mxu0 %v145
    %245 = vmatprep.subr.mxu0 0.0
    %246 = vmatpush1.msra.mxu0 %v146
    %247 = vmatprep.subr.mxu0 0.0
    %248 = vmatpush1.msra.mxu0 %v147
    %249 = vmatprep.subr.mxu0 0.0
    %250 = vmatpush1.msra.mxu0 %v148
    %251 = vmatprep.subr.mxu0 0.0
    %252 = vmatpush1.msra.mxu0 %v149
    %253 = vmatprep.mubr.f32.mxu0 %v111
    %254 = vmatmul.mubr.f32.gmra.mrb[0].mxu0 %v110
    %v255 = vpop.f32.mrb[0].mxu0
    %v256 = vadd.f32 %v187, %v255
    %v257 = vpop.f32.mrb[0].mxu0
    %258 = vmatprep.mubr.f32.mxu0 %v115
    %259 = vmatmul.mubr.f32.gmra.mrb[0].mxu0 %v114
    %v260 = vpop.f32.mrb[0].mxu0
    %v261 = vadd.f32 %v187, %v260
    %v262 = vpop.f32.mrb[0].mxu0
    %263 = vdwg.mxu0
    %264 = vmatprep.subr.mxu0 0.0
    %265 = vmatpush1.msra.mxu0 %v150
    %266 = vmatprep.subr.mxu0 0.0
    %267 = vmatpush1.msra.mxu0 %v151
    %268 = vmatprep.subr.mxu0 0.0
    %269 = vmatpush1.msra.mxu0 %v152
    %270 = vmatprep.subr.mxu0 0.0
    %271 = vmatpush1.msra.mxu0 %v153
    %272 = vmatprep.subr.mxu0 0.0
    %273 = vmatpush1.msra.mxu0 %v154
    %274 = vmatprep.subr.mxu0 0.0
    %275 = vmatpush1.msra.mxu0 %v155
    %276 = vmatprep.subr.mxu0 0.0
    %277 = vmatpush1.msra.mxu0 %v156
    %278 = vmatprep.subr.mxu0 0.0
    %279 = vmatpush1.msra.mxu0 %v157
    %280 = vmatprep.subr.mxu0 0.0
    %281 = vmatpush1.msra.mxu0 %v158
    %282 = vmatprep.subr.mxu0 0.0
    %283 = vmatpush1.msra.mxu0 %v159
    %284 = vmatprep.subr.mxu0 0.0
    %285 = vmatpush1.msra.mxu0 %v160
    %286 = vmatprep.subr.mxu0 0.0
    %287 = vmatpush1.msra.mxu0 %v161
    %288 = vmatprep.subr.mxu0 0.0
    %289 = vmatpush1.msra.mxu0 %v162
    %290 = vmatprep.subr.mxu0 0.0
    %291 = vmatpush1.msra.mxu0 %v163
    %292 = vmatprep.subr.mxu0 0.0
    %293 = vmatpush1.msra.mxu0 %v164
    %294 = vmatprep.subr.mxu0 0.0
    %295 = vmatpush1.msra.mxu0 %v165
    %296 = vmatprep.subr.mxu0 0.0
    %297 = vmatpush1.msra.mxu0 %v166
    %298 = vmatprep.subr.mxu0 0.0
    %299 = vmatpush1.msra.mxu0 %v167
    %300 = vmatprep.subr.mxu0 0.0
    %301 = vmatpush1.msra.mxu0 %v168
    %302 = vmatprep.subr.mxu0 0.0
    %303 = vmatpush1.msra.mxu0 %v169
    %304 = vmatprep.subr.mxu0 0.0
    %305 = vmatpush1.msra.mxu0 %v170
    %306 = vmatprep.subr.mxu0 0.0
    %307 = vmatpush1.msra.mxu0 %v171
    %308 = vmatprep.subr.mxu0 0.0
    %309 = vmatpush1.msra.mxu0 %v172
    %310 = vmatprep.subr.mxu0 0.0
    %311 = vmatpush1.msra.mxu0 %v173
    %312 = vmatprep.subr.mxu0 0.0
    %313 = vmatpush1.msra.mxu0 %v174
    %314 = vmatprep.subr.mxu0 0.0
    %315 = vmatpush1.msra.mxu0 %v175
    %316 = vmatprep.subr.mxu0 0.0
    %317 = vmatpush1.msra.mxu0 %v176
    %318 = vmatprep.subr.mxu0 0.0
    %319 = vmatpush1.msra.mxu0 %v177
    %320 = vmatprep.subr.mxu0 0.0
    %321 = vmatpush1.msra.mxu0 %v178
    %322 = vmatprep.subr.mxu0 0.0
    %323 = vmatpush1.msra.mxu0 %v179
    %324 = vmatprep.subr.mxu0 0.0
    %325 = vmatpush1.msra.mxu0 %v180
    %326 = vmatprep.subr.mxu0 0.0
    %327 = vmatpush1.msra.mxu0 %v181
    %328 = vmatprep.mubr.f32.mxu0 %v113
    %329 = vmatmul.mubr.f32.gmra.mrb[0].mxu0 %v112
    %v330 = vpop.f32.mrb[0].mxu0
    %v331 = vadd.f32 %v256, %v330
    %v332 = vpop.f32.mrb[0].mxu0
    %333 = vmatprep.mubr.f32.mxu0 %v117
    %334 = vmatmul.mubr.f32.gmra.mrb[0].mxu0 %v116
    %v335 = vpop.f32.mrb[0].mxu0
    %v336 = vadd.f32 %v261, %v335
    %v337 = vpop.f32.mrb[0].mxu0
    %338 = vdwg.mxu0
    %v339 = vmax.f32 %v331, 0.0
    %v340 = vmax.f32 %v336, 0.0
    %v341 = vld [vmem:[%s4] sm:$0x1]
    %v343 = vlaneseq
    %v344 = vshrl.u32 %v343, 7
    %v345 = vsub.s32 0, %v344
    %v346 = vrot.slane %v341, %v345
    %v348 = vmul.f32 %v339, %v346
    %v349 = vmul.f32 %v340, %v346
    %v350 = vld [vmem:[%s5] sm:$0x1]
    %v352 = vlaneseq
    %v353 = vshrl.u32 %v352, 7
    %v354 = vsub.s32 0, %v353
    %v355 = vrot.slane %v350, %v354
    %v357 = vadd.f32 %v348, %v355
    %v358 = vadd.f32 %v349, %v355
    %v359 = vld [vmem:[%s1] sm:$0xff]
    %v360 = vld [vmem:[%s1 + $0x8] sm:$0xff]
    %v361 = vld [vmem:[%s6] sm:$0xff]
    %v362 = vld [vmem:[%s6 + $0x8] sm:$0xff]
    %v363 = vld [vmem:[%s6 + $0x10] sm:$0xff]
    %v364 = vld [vmem:[%s6 + $0x18] sm:$0xff]
    %v365 = vld [vmem:[%s6 + $0x20] sm:$0xff]
    %v366 = vld [vmem:[%s6 + $0x28] sm:$0xff]
    %v367 = vld [vmem:[%s6 + $0x30] sm:$0xff]
    %v368 = vld [vmem:[%s6 + $0x38] sm:$0xff]
    %v369 = vld [vmem:[%s6 + $0x40] sm:$0xff]
    %v370 = vld [vmem:[%s6 + $0x48] sm:$0xff]
    %v371 = vld [vmem:[%s6 + $0x50] sm:$0xff]
    %v372 = vld [vmem:[%s6 + $0x58] sm:$0xff]
    %v373 = vld [vmem:[%s6 + $0x60] sm:$0xff]
    %v374 = vld [vmem:[%s6 + $0x68] sm:$0xff]
    %v375 = vld [vmem:[%s6 + $0x70] sm:$0xff]
    %v376 = vld [vmem:[%s6 + $0x78] sm:$0xff]
    %v377 = vld [vmem:[%s7] sm:$0x1]
    %v379 = vlaneseq
    %v380 = vshrl.u32 %v379, 7
    %v381 = vsub.s32 0, %v380
    %v382 = vrot.slane %v377, %v381
    %384 = vmatprep.subr.mxu0 0.0
    %385 = vmatpush1.msra.mxu0 %v361
    %386 = vmatprep.subr.mxu0 0.0
    %387 = vmatpush1.msra.mxu0 %v362
    %388 = vmatprep.subr.mxu0 0.0
    %389 = vmatpush1.msra.mxu0 %v363
    %390 = vmatprep.subr.mxu0 0.0
    %391 = vmatpush1.msra.mxu0 %v364
    %392 = vmatprep.subr.mxu0 0.0
    %393 = vmatpush1.msra.mxu0 %v365
    %394 = vmatprep.subr.mxu0 0.0
    %395 = vmatpush1.msra.mxu0 %v366
    %396 = vmatprep.subr.mxu0 0.0
    %397 = vmatpush1.msra.mxu0 %v367
    %398 = vmatprep.subr.mxu0 0.0
    %399 = vmatpush1.msra.mxu0 %v368
    %400 = vmatprep.subr.mxu0 0.0
    %401 = vmatpush1.msra.mxu0 %v369
    %402 = vmatprep.subr.mxu0 0.0
    %403 = vmatpush1.msra.mxu0 %v370
    %404 = vmatprep.subr.mxu0 0.0
    %405 = vmatpush1.msra.mxu0 %v371
    %406 = vmatprep.subr.mxu0 0.0
    %407 = vmatpush1.msra.mxu0 %v372
    %408 = vmatprep.subr.mxu0 0.0
    %409 = vmatpush1.msra.mxu0 %v373
    %410 = vmatprep.subr.mxu0 0.0
    %411 = vmatpush1.msra.mxu0 %v374
    %412 = vmatprep.subr.mxu0 0.0
    %413 = vmatpush1.msra.mxu0 %v375
    %414 = vmatprep.subr.mxu0 0.0
    %415 = vmatpush1.msra.mxu0 %v376
    %416 = vmatprep.subr.mxu0 0.0
    %417 = vmatpush1.msra.mxu0 0.0
    %418 = vmatprep.subr.mxu0 0.0
    %419 = vmatpush1.msra.mxu0 0.0
    %420 = vmatprep.subr.mxu0 0.0
    %421 = vmatpush1.msra.mxu0 0.0
    %422 = vmatprep.subr.mxu0 0.0
    %423 = vmatpush1.msra.mxu0 0.0
    %424 = vmatprep.subr.mxu0 0.0
    %425 = vmatpush1.msra.mxu0 0.0
    %426 = vmatprep.subr.mxu0 0.0
    %427 = vmatpush1.msra.mxu0 0.0
    %428 = vmatprep.subr.mxu0 0.0
    %429 = vmatpush1.msra.mxu0 0.0
    %430 = vmatprep.subr.mxu0 0.0
    %431 = vmatpush1.msra.mxu0 0.0
    %432 = vmatprep.subr.mxu0 0.0
    %433 = vmatpush1.msra.mxu0 0.0
    %434 = vmatprep.subr.mxu0 0.0
    %435 = vmatpush1.msra.mxu0 0.0
    %436 = vmatprep.subr.mxu0 0.0
    %437 = vmatpush1.msra.mxu0 0.0
    %438 = vmatprep.subr.mxu0 0.0
    %439 = vmatpush1.msra.mxu0 0.0
    %440 = vmatprep.subr.mxu0 0.0
    %441 = vmatpush1.msra.mxu0 0.0
    %442 = vmatprep.subr.mxu0 0.0
    %443 = vmatpush1.msra.mxu0 0.0
    %444 = vmatprep.subr.mxu0 0.0
    %445 = vmatpush1.msra.mxu0 0.0
    %446 = vmatprep.subr.mxu0 0.0
    %447 = vmatpush1.msra.mxu0 0.0
    %448 = vmatprep.mubr.f32.mxu0 0.0
    %449 = vmatmul.mubr.f32.gmra.mrb[0].mxu0 %v359
    %v450 = vpop.f32.mrb[0].mxu0
    %v451 = vadd.f32 %v382, %v450
    %v452 = vpop.f32.mrb[0].mxu0
    %453 = vmatprep.mubr.f32.mxu0 0.0
    %454 = vmatmul.mubr.f32.gmra.mrb[0].mxu0 %v360
    %v455 = vpop.f32.mrb[0].mxu0
    %v456 = vadd.f32 %v382, %v455
    %v457 = vpop.f32.mrb[0].mxu0
    %458 = vdwg.mxu0
    %v459 = vmax.f32 %v451, 0.0
    %v460 = vmax.f32 %v456, 0.0
    %v461 = vld [vmem:[%s8] sm:$0x1]
    %v463 = vlaneseq
    %v464 = vshrl.u32 %v463, 7
    %v465 = vsub.s32 0, %v464
    %v466 = vrot.slane %v461, %v465
    %v468 = vmul.f32 %v459, %v466
    %v469 = vmul.f32 %v460, %v466
    %v470 = vld [vmem:[%s9] sm:$0x1]
    %v472 = vlaneseq
    %v473 = vshrl.u32 %v472, 7
    %v474 = vsub.s32 0, %v473
    %v475 = vrot.slane %v470, %v474
    %v477 = vadd.f32 %v468, %v475
    %v478 = vadd.f32 %v469, %v475
    %v479 = vld [vmem:[#allocation6] sm:$0xff]
    %v480 = vld [vmem:[#allocation6 + $0x8] sm:$0xff]
    %v481 = vld [vmem:[#allocation6 + $0x10] sm:$0xff]
    %v482 = vld [vmem:[#allocation6 + $0x18] sm:$0xff]
    %v483 = vld [vmem:[#allocation6 + $0x20] sm:$0xff]
    %v484 = vld [vmem:[#allocation6 + $0x28] sm:$0xff]
    %v485 = vld [vmem:[#allocation6 + $0x30] sm:$0xff]
    %v486 = vld [vmem:[#allocation6 + $0x38] sm:$0xff]
    %v487 = vld [vmem:[#allocation6 + $0x40] sm:$0xff]
    %v488 = vld [vmem:[#allocation6 + $0x48] sm:$0xff]
    %v489 = vld [vmem:[#allocation6 + $0x50] sm:$0xff]
    %v490 = vld [vmem:[#allocation6 + $0x58] sm:$0xff]
    %v491 = vld [vmem:[#allocation6 + $0x60] sm:$0xff]
    %v492 = vld [vmem:[#allocation6 + $0x68] sm:$0xff]
    %v493 = vld [vmem:[#allocation6 + $0x70] sm:$0xff]
    %v494 = vld [vmem:[#allocation6 + $0x78] sm:$0xff]
    %v495 = vld [vmem:[#allocation6 + $0x80] sm:$0xff]
    %v496 = vld [vmem:[#allocation6 + $0x88] sm:$0xff]
    %v497 = vld [vmem:[#allocation6 + $0x90] sm:$0xff]
    %v498 = vld [vmem:[#allocation6 + $0x98] sm:$0xff]
    %v499 = vld [vmem:[#allocation6 + $0xa0] sm:$0xff]
    %v500 = vld [vmem:[#allocation6 + $0xa8] sm:$0xff]
    %v501 = vld [vmem:[#allocation6 + $0xb0] sm:$0xff]
    %v502 = vld [vmem:[#allocation6 + $0xb8] sm:$0xff]
    %v503 = vld [vmem:[#allocation6 + $0xc0] sm:$0xff]
    %v504 = vld [vmem:[#allocation6 + $0xc8] sm:$0xff]
    %v505 = vld [vmem:[#allocation6 + $0xd0] sm:$0xff]
    %v506 = vld [vmem:[#allocation6 + $0xd8] sm:$0xff]
    %v507 = vld [vmem:[#allocation6 + $0xe0] sm:$0xff]
    %v508 = vld [vmem:[#allocation6 + $0xe8] sm:$0xff]
    %v509 = vld [vmem:[#allocation6 + $0xf0] sm:$0xff]
    %v510 = vld [vmem:[#allocation6 + $0xf8] sm:$0xff]
    %v511 = vld [vmem:[%s11] sm:$0x1]
    %v513 = vlaneseq
    %v514 = vshrl.u32 %v513, 7
    %v515 = vsub.s32 0, %v514
    %v516 = vrot.slane %v511, %v515
    %518 = vmatprep.subr.mxu0 0.0
    %519 = vmatpush1.msra.mxu0 %v479
    %520 = vmatprep.subr.mxu0 0.0
    %521 = vmatpush1.msra.mxu0 %v480
    %522 = vmatprep.subr.mxu0 0.0
    %523 = vmatpush1.msra.mxu0 %v481
    %524 = vmatprep.subr.mxu0 0.0
    %525 = vmatpush1.msra.mxu0 %v482
    %526 = vmatprep.subr.mxu0 0.0
    %527 = vmatpush1.msra.mxu0 %v483
    %528 = vmatprep.subr.mxu0 0.0
    %529 = vmatpush1.msra.mxu0 %v484
    %530 = vmatprep.subr.mxu0 0.0
    %531 = vmatpush1.msra.mxu0 %v485
    %532 = vmatprep.subr.mxu0 0.0
    %533 = vmatpush1.msra.mxu0 %v486
    %534 = vmatprep.subr.mxu0 0.0
    %535 = vmatpush1.msra.mxu0 %v487
    %536 = vmatprep.subr.mxu0 0.0
    %537 = vmatpush1.msra.mxu0 %v488
    %538 = vmatprep.subr.mxu0 0.0
    %539 = vmatpush1.msra.mxu0 %v489
    %540 = vmatprep.subr.mxu0 0.0
    %541 = vmatpush1.msra.mxu0 %v490
    %542 = vmatprep.subr.mxu0 0.0
    %543 = vmatpush1.msra.mxu0 %v491
    %544 = vmatprep.subr.mxu0 0.0
    %545 = vmatpush1.msra.mxu0 %v492
    %546 = vmatprep.subr.mxu0 0.0
    %547 = vmatpush1.msra.mxu0 %v493
    %548 = vmatprep.subr.mxu0 0.0
    %549 = vmatpush1.msra.mxu0 %v494
    %550 = vmatprep.subr.mxu0 0.0
    %551 = vmatpush1.msra.mxu0 %v495
    %552 = vmatprep.subr.mxu0 0.0
    %553 = vmatpush1.msra.mxu0 %v496
    %554 = vmatprep.subr.mxu0 0.0
    %555 = vmatpush1.msra.mxu0 %v497
    %556 = vmatprep.subr.mxu0 0.0
    %557 = vmatpush1.msra.mxu0 %v498
    %558 = vmatprep.subr.mxu0 0.0
    %559 = vmatpush1.msra.mxu0 %v499
    %560 = vmatprep.subr.mxu0 0.0
    %561 = vmatpush1.msra.mxu0 %v500
    %562 = vmatprep.subr.mxu0 0.0
    %563 = vmatpush1.msra.mxu0 %v501
    %564 = vmatprep.subr.mxu0 0.0
    %565 = vmatpush1.msra.mxu0 %v502
    %566 = vmatprep.subr.mxu0 0.0
    %567 = vmatpush1.msra.mxu0 %v503
    %568 = vmatprep.subr.mxu0 0.0
    %569 = vmatpush1.msra.mxu0 %v504
    %570 = vmatprep.subr.mxu0 0.0
    %571 = vmatpush1.msra.mxu0 %v505
    %572 = vmatprep.subr.mxu0 0.0
    %573 = vmatpush1.msra.mxu0 %v506
    %574 = vmatprep.subr.mxu0 0.0
    %575 = vmatpush1.msra.mxu0 %v507
    %576 = vmatprep.subr.mxu0 0.0
    %577 = vmatpush1.msra.mxu0 %v508
    %578 = vmatprep.subr.mxu0 0.0
    %579 = vmatpush1.msra.mxu0 %v509
    %580 = vmatprep.subr.mxu0 0.0
    %581 = vmatpush1.msra.mxu0 %v510
    %582 = vmatprep.mubr.f32.mxu0 %v477
    %583 = vmatmul.mubr.f32.gmra.mrb[0].mxu0 %v357
    %v584 = vpop.f32.mrb[0].mxu0
    %v585 = vadd.f32 %v516, %v584
    %v586 = vpop.f32.mrb[0].mxu0
    %587 = vmatprep.mubr.f32.mxu0 %v478
    %588 = vmatmul.mubr.f32.gmra.mrb[0].mxu0 %v358
    %v589 = vpop.f32.mrb[0].mxu0
    %v590 = vadd.f32 %v516, %v589
    %v591 = vpop.f32.mrb[0].mxu0
    %592 = vdwg.mxu0
    %v593 = vmax.f32 %v585, 0.0
    %v594 = vmax.f32 %v590, 0.0
    %v595 = vld [vmem:[#allocation8] sm:$0xff]
    %v596 = vld [vmem:[#allocation8 + $0x8] sm:$0xff]
    %v597 = vld [vmem:[#allocation8 + $0x10] sm:$0xff]
    %v598 = vld [vmem:[#allocation8 + $0x18] sm:$0xff]
    %v599 = vld [vmem:[#allocation8 + $0x20] sm:$0xff]
    %v600 = vld [vmem:[#allocation8 + $0x28] sm:$0xff]
    %v601 = vld [vmem:[#allocation8 + $0x30] sm:$0xff]
    %v602 = vld [vmem:[#allocation8 + $0x38] sm:$0xff]
    %v603 = vld [vmem:[#allocation8 + $0x40] sm:$0xff]
    %v604 = vld [vmem:[#allocation8 + $0x48] sm:$0xff]
    %v605 = vld [vmem:[#allocation8 + $0x50] sm:$0xff]
    %v606 = vld [vmem:[#allocation8 + $0x58] sm:$0xff]
    %v607 = vld [vmem:[#allocation8 + $0x60] sm:$0xff]
    %v608 = vld [vmem:[#allocation8 + $0x68] sm:$0xff]
    %v609 = vld [vmem:[#allocation8 + $0x70] sm:$0xff]
    %v610 = vld [vmem:[#allocation8 + $0x78] sm:$0xff]
    %v611 = vld [vmem:[%s13] sm:$0x1]
    %v613 = vlaneseq
    %v614 = vshrl.u32 %v613, 7
    %v615 = vsub.s32 0, %v614
    %v616 = vrot.slane %v611, %v615
    %618 = vmatprep.subr.mxu0 0.0
    %619 = vmatpush1.msra.mxu0 %v595
    %620 = vmatprep.subr.mxu0 0.0
    %621 = vmatpush1.msra.mxu0 %v596
    %622 = vmatprep.subr.mxu0 0.0
    %623 = vmatpush1.msra.mxu0 %v597
    %624 = vmatprep.subr.mxu0 0.0
    %625 = vmatpush1.msra.mxu0 %v598
    %626 = vmatprep.subr.mxu0 0.0
    %627 = vmatpush1.msra.mxu0 %v599
    %628 = vmatprep.subr.mxu0 0.0
    %629 = vmatpush1.msra.mxu0 %v600
    %630 = vmatprep.subr.mxu0 0.0
    %631 = vmatpush1.msra.mxu0 %v601
    %632 = vmatprep.subr.mxu0 0.0
    %633 = vmatpush1.msra.mxu0 %v602
    %634 = vmatprep.subr.mxu0 0.0
    %635 = vmatpush1.msra.mxu0 %v603
    %636 = vmatprep.subr.mxu0 0.0
    %637 = vmatpush1.msra.mxu0 %v604
    %638 = vmatprep.subr.mxu0 0.0
    %639 = vmatpush1.msra.mxu0 %v605
    %640 = vmatprep.subr.mxu0 0.0
    %641 = vmatpush1.msra.mxu0 %v606
    %642 = vmatprep.subr.mxu0 0.0
    %643 = vmatpush1.msra.mxu0 %v607
    %644 = vmatprep.subr.mxu0 0.0
    %645 = vmatpush1.msra.mxu0 %v608
    %646 = vmatprep.subr.mxu0 0.0
    %647 = vmatpush1.msra.mxu0 %v609
    %648 = vmatprep.subr.mxu0 0.0
    %649 = vmatpush1.msra.mxu0 %v610
    %650 = vmatprep.subr.mxu0 0.0
    %651 = vmatpush1.msra.mxu0 0.0
    %652 = vmatprep.subr.mxu0 0.0
    %653 = vmatpush1.msra.mxu0 0.0
    %654 = vmatprep.subr.mxu0 0.0
    %655 = vmatpush1.msra.mxu0 0.0
    %656 = vmatprep.subr.mxu0 0.0
    %657 = vmatpush1.msra.mxu0 0.0
    %658 = vmatprep.subr.mxu0 0.0
    %659 = vmatpush1.msra.mxu0 0.0
    %660 = vmatprep.subr.mxu0 0.0
    %661 = vmatpush1.msra.mxu0 0.0
    %662 = vmatprep.subr.mxu0 0.0
    %663 = vmatpush1.msra.mxu0 0.0
    %664 = vmatprep.subr.mxu0 0.0
    %665 = vmatpush1.msra.mxu0 0.0
    %666 = vmatprep.subr.mxu0 0.0
    %667 = vmatpush1.msra.mxu0 0.0
    %668 = vmatprep.subr.mxu0 0.0
    %669 = vmatpush1.msra.mxu0 0.0
    %670 = vmatprep.subr.mxu0 0.0
    %671 = vmatpush1.msra.mxu0 0.0
    %672 = vmatprep.subr.mxu0 0.0
    %673 = vmatpush1.msra.mxu0 0.0
    %674 = vmatprep.subr.mxu0 0.0
    %675 = vmatpush1.msra.mxu0 0.0
    %676 = vmatprep.subr.mxu0 0.0
    %677 = vmatpush1.msra.mxu0 0.0
    %678 = vmatprep.subr.mxu0 0.0
    %679 = vmatpush1.msra.mxu0 0.0
    %680 = vmatprep.subr.mxu0 0.0
    %681 = vmatpush1.msra.mxu0 0.0
    %682 = vmatprep.mubr.f32.mxu0 0.0
    %683 = vmatmul.mubr.f32.gmra.mrb[0].mxu0 %v593
    %v684 = vpop.f32.mrb[0].mxu0
    %v685 = vadd.f32 %v616, %v684
    %v686 = vpop.f32.mrb[0].mxu0
    %687 = vmatprep.mubr.f32.mxu0 0.0
    %688 = vmatmul.mubr.f32.gmra.mrb[0].mxu0 %v594
    %v689 = vpop.f32.mrb[0].mxu0
    %v690 = vadd.f32 %v616, %v689
    %v691 = vpop.f32.mrb[0].mxu0
    %692 = vdwg.mxu0
    %v693 = vadd.f32 %v685, %v357
    %v694 = vadd.f32 %v690, %v358
    %v695 = vld [vmem:[%s14] sm:$0xff]
    %v696 = vld [vmem:[%s14 + $0x8] sm:$0xff]
    %v697 = vld [vmem:[%s14 + $0x10] sm:$0xff]
    %v698 = vld [vmem:[%s14 + $0x18] sm:$0xff]
    %v699 = vld [vmem:[%s14 + $0x20] sm:$0xff]
    %v700 = vld [vmem:[%s14 + $0x28] sm:$0xff]
    %v701 = vld [vmem:[%s14 + $0x30] sm:$0xff]
    %v702 = vld [vmem:[%s14 + $0x38] sm:$0xff]
    %v703 = vld [vmem:[%s14 + $0x40] sm:$0xff]
    %v704 = vld [vmem:[%s14 + $0x48] sm:$0xff]
    %v705 = vld [vmem:[%s14 + $0x50] sm:$0xff]
    %v706 = vld [vmem:[%s14 + $0x58] sm:$0xff]
    %v707 = vld [vmem:[%s14 + $0x60] sm:$0xff]
    %v708 = vld [vmem:[%s14 + $0x68] sm:$0xff]
    %v709 = vld [vmem:[%s14 + $0x70] sm:$0xff]
    %v710 = vld [vmem:[%s14 + $0x78] sm:$0xff]
    %v711 = vld [vmem:[%s15] sm:$0x1]
    %v712 = vld [vmem:[%s16] sm:$0x1]
    %v713 = vld [vmem:[#allocation2] sm:$0x1]
    %v715 = vlaneseq
    %v716 = vshrl.u32 %v715, 7
    %v717 = vsub.s32 0, %v716
    %v718 = vrot.slane %v711, %v717
    %720 = vmatprep.subr.mxu0 0.0
    %721 = vmatpush1.msra.mxu0 %v695
    %722 = vmatprep.subr.mxu0 0.0
    %723 = vmatpush1.msra.mxu0 %v696
    %724 = vmatprep.subr.mxu0 0.0
    %725 = vmatpush1.msra.mxu0 %v697
    %726 = vmatprep.subr.mxu0 0.0
    %727 = vmatpush1.msra.mxu0 %v698
    %728 = vmatprep.subr.mxu0 0.0
    %729 = vmatpush1.msra.mxu0 %v699
    %730 = vmatprep.subr.mxu0 0.0
    %731 = vmatpush1.msra.mxu0 %v700
    %732 = vmatprep.subr.mxu0 0.0
    %733 = vmatpush1.msra.mxu0 %v701
    %734 = vmatprep.subr.mxu0 0.0
    %735 = vmatpush1.msra.mxu0 %v702
    %736 = vmatprep.subr.mxu0 0.0
    %737 = vmatpush1.msra.mxu0 %v703
    %738 = vmatprep.subr.mxu0 0.0
    %739 = vmatpush1.msra.mxu0 %v704
    %740 = vmatprep.subr.mxu0 0.0
    %741 = vmatpush1.msra.mxu0 %v705
    %742 = vmatprep.subr.mxu0 0.0
    %743 = vmatpush1.msra.mxu0 %v706
    %744 = vmatprep.subr.mxu0 0.0
    %745 = vmatpush1.msra.mxu0 %v707
    %746 = vmatprep.subr.mxu0 0.0
    %747 = vmatpush1.msra.mxu0 %v708
    %748 = vmatprep.subr.mxu0 0.0
    %749 = vmatpush1.msra.mxu0 %v709
    %750 = vmatprep.subr.mxu0 0.0
    %751 = vmatpush1.msra.mxu0 %v710
    %752 = vmatprep.subr.mxu0 0.0
    %753 = vmatpush1.msra.mxu0 0.0
    %754 = vmatprep.subr.mxu0 0.0
    %755 = vmatpush1.msra.mxu0 0.0
    %756 = vmatprep.subr.mxu0 0.0
    %757 = vmatpush1.msra.mxu0 0.0
    %758 = vmatprep.subr.mxu0 0.0
    %759 = vmatpush1.msra.mxu0 0.0
    %760 = vmatprep.subr.mxu0 0.0
    %761 = vmatpush1.msra.mxu0 0.0
    %762 = vmatprep.subr.mxu0 0.0
    %763 = vmatpush1.msra.mxu0 0.0
    %764 = vmatprep.subr.mxu0 0.0
    %765 = vmatpush1.msra.mxu0 0.0
    %766 = vmatprep.subr.mxu0 0.0
    %767 = vmatpush1.msra.mxu0 0.0
    %768 = vmatprep.subr.mxu0 0.0
    %769 = vmatpush1.msra.mxu0 0.0
    %770 = vmatprep.subr.mxu0 0.0
    %771 = vmatpush1.msra.mxu0 0.0
    %772 = vmatprep.subr.mxu0 0.0
    %773 = vmatpush1.msra.mxu0 0.0
    %774 = vmatprep.subr.mxu0 0.0
    %775 = vmatpush1.msra.mxu0 0.0
    %776 = vmatprep.subr.mxu0 0.0
    %777 = vmatpush1.msra.mxu0 0.0
    %778 = vmatprep.subr.mxu0 0.0
    %779 = vmatpush1.msra.mxu0 0.0
    %780 = vmatprep.subr.mxu0 0.0
    %781 = vmatpush1.msra.mxu0 0.0
    %782 = vmatprep.subr.mxu0 0.0
    %783 = vmatpush1.msra.mxu0 0.0
    %784 = vmatprep.mubr.f32.mxu0 0.0
    %785 = vmatmul.mubr.f32.gmra.mrb[0].mxu0 %v693
    %v786 = vpop.f32.mrb[0].mxu0
    %v787 = vadd.f32 %v718, %v786
    %v788 = vpop.f32.mrb[0].mxu0
    %789 = vmatprep.mubr.f32.mxu0 0.0
    %790 = vmatmul.mubr.f32.gmra.mrb[0].mxu0 %v694
    %v791 = vpop.f32.mrb[0].mxu0
    %v792 = vadd.f32 %v718, %v791
    %v793 = vpop.f32.mrb[0].mxu0
    %794 = vdwg.mxu0
    %v795 = vmax.f32 %v787, 0.0
    %v796 = vmax.f32 %v792, 0.0
    %v798 = vlaneseq
    %v799 = vshrl.u32 %v798, 7
    %v800 = vsub.s32 0, %v799
    %v801 = vrot.slane %v712, %v800
    %v803 = vmul.f32 %v795, %v801
    %v804 = vmul.f32 %v796, %v801
    %vm805 = vcmask 523264
    %v806 = vsel %vm805, %v803, 0.0
    %807 = vadd.xlane.f32.xlu0 %v806
    %v808 = vpop.xlane.xlu0 %807
    %v809 = vsel %vm805, %v804, 0.0
    %810 = vadd.xlane.f32.xlu0 %v809
    %v811 = vpop.xlane.xlu0 %810
    %v813 = vlaneseq
    %v814 = vshrl.u32 %v813, 7
    %v815 = vsub.s32 0, %v814
    %v816 = vrot.slane %v713, %v815
    %v818 = vadd.f32 %v808, %v816
    %v819 = vadd.f32 %v811, %v816
    %vm820 = vcmask 7168
    %821 = vst.msk [vmem:[%s18] sm:$0xff] %vm820, %v818
    %822 = vst.msk [vmem:[%s18 + $0x8] sm:$0xff] %vm820, %v819
    %823 = vmatprep.subr.mxu0 0.0
    %824 = vmatpush1.msra.mxu0 %v695
    %825 = vmatprep.subr.mxu0 0.0
    %826 = vmatpush1.msra.mxu0 %v696
    %827 = vmatprep.subr.mxu0 0.0
    %828 = vmatpush1.msra.mxu0 %v697
    %829 = vmatprep.subr.mxu0 0.0
    %830 = vmatpush1.msra.mxu0 %v698
    %831 = vmatprep.subr.mxu0 0.0
    %832 = vmatpush1.msra.mxu0 %v699
    %833 = vmatprep.subr.mxu0 0.0
    %834 = vmatpush1.msra.mxu0 %v700
    %835 = vmatprep.subr.mxu0 0.0
    %836 = vmatpush1.msra.mxu0 %v701
    %837 = vmatprep.subr.mxu0 0.0
    %838 = vmatpush1.msra.mxu0 %v702
    %839 = vmatprep.subr.mxu0 0.0
    %840 = vmatpush1.msra.mxu0 %v703
    %841 = vmatprep.subr.mxu0 0.0
    %842 = vmatpush1.msra.mxu0 %v704
    %843 = vmatprep.subr.mxu0 0.0
    %844 = vmatpush1.msra.mxu0 %v705
    %845 = vmatprep.subr.mxu0 0.0
    %846 = vmatpush1.msra.mxu0 %v706
    %847 = vmatprep.subr.mxu0 0.0
    %848 = vmatpush1.msra.mxu0 %v707
    %849 = vmatprep.subr.mxu0 0.0
    %850 = vmatpush1.msra.mxu0 %v708
    %851 = vmatprep.subr.mxu0 0.0
    %852 = vmatpush1.msra.mxu0 %v709
    %853 = vmatprep.subr.mxu0 0.0
    %854 = vmatpush1.msra.mxu0 %v710
    %855 = vmatprep.subr.mxu0 0.0
    %856 = vmatpush1.msra.mxu0 0.0
    %857 = vmatprep.subr.mxu0 0.0
    %858 = vmatpush1.msra.mxu0 0.0
    %859 = vmatprep.subr.mxu0 0.0
    %860 = vmatpush1.msra.mxu0 0.0
    %861 = vmatprep.subr.mxu0 0.0
    %862 = vmatpush1.msra.mxu0 0.0
    %863 = vmatprep.subr.mxu0 0.0
    %864 = vmatpush1.msra.mxu0 0.0
    %865 = vmatprep.subr.mxu0 0.0
    %866 = vmatpush1.msra.mxu0 0.0
    %867 = vmatprep.subr.mxu0 0.0
    %868 = vmatpush1.msra.mxu0 0.0
    %869 = vmatprep.subr.mxu0 0.0
    %870 = vmatpush1.msra.mxu0 0.0
    %871 = vmatprep.subr.mxu0 0.0
    %872 = vmatpush1.msra.mxu0 0.0
    %873 = vmatprep.subr.mxu0 0.0
    %874 = vmatpush1.msra.mxu0 0.0
    %875 = vmatprep.subr.mxu0 0.0
    %876 = vmatpush1.msra.mxu0 0.0
    %877 = vmatprep.subr.mxu0 0.0
    %878 = vmatpush1.msra.mxu0 0.0
    %879 = vmatprep.subr.mxu0 0.0
    %880 = vmatpush1.msra.mxu0 0.0
    %881 = vmatprep.subr.mxu0 0.0
    %882 = vmatpush1.msra.mxu0 0.0
    %883 = vmatprep.subr.mxu0 0.0
    %884 = vmatpush1.msra.mxu0 0.0
    %885 = vmatprep.subr.mxu0 0.0
    %886 = vmatpush1.msra.mxu0 0.0
    %887 = vmatprep.mubr.f32.mxu0 0.0
    %888 = vmatmul.mubr.f32.gmra.mrb[0].mxu0 %v357
    %v889 = vpop.f32.mrb[0].mxu0
    %v890 = vadd.f32 %v718, %v889
    %v891 = vpop.f32.mrb[0].mxu0
    %892 = vmatprep.mubr.f32.mxu0 0.0
    %893 = vmatmul.mubr.f32.gmra.mrb[0].mxu0 %v358
    %v894 = vpop.f32.mrb[0].mxu0
    %v895 = vadd.f32 %v718, %v894
    %v896 = vpop.f32.mrb[0].mxu0
    %897 = vdwg.mxu0
    %v898 = vmax.f32 %v890, 0.0
    %v899 = vmax.f32 %v895, 0.0
    %v900 = vmul.f32 %v898, %v801
    %v901 = vmul.f32 %v899, %v801
    %v902 = vsel %vm805, %v900, 0.0
    %903 = vadd.xlane.f32.xlu0 %v902
    %v904 = vpop.xlane.xlu0 %903
    %v905 = vsel %vm805, %v901, 0.0
    %906 = vadd.xlane.f32.xlu0 %v905
    %v907 = vpop.xlane.xlu0 %906
    %v908 = vadd.f32 %v904, %v816
    %v909 = vadd.f32 %v907, %v816
    %910 = vst.msk [vmem:[%s19] sm:$0xff] %vm820, %v908
    %911 = vst.msk [vmem:[%s19 + $0x8] sm:$0xff] %vm820, %v909
    %912 = vmatprep.subr.mxu0 0.0
    %913 = vmatpush1.msra.mxu0 %v695
    %914 = vmatprep.subr.mxu0 0.0
    %915 = vmatpush1.msra.mxu0 %v696
    %916 = vmatprep.subr.mxu0 0.0
    %917 = vmatpush1.msra.mxu0 %v697
    %918 = vmatprep.subr.mxu0 0.0
    %919 = vmatpush1.msra.mxu0 %v698
    %920 = vmatprep.subr.mxu0 0.0
    %921 = vmatpush1.msra.mxu0 %v699
    %922 = vmatprep.subr.mxu0 0.0
    %923 = vmatpush1.msra.mxu0 %v700
    %924 = vmatprep.subr.mxu0 0.0
    %925 = vmatpush1.msra.mxu0 %v701
    %926 = vmatprep.subr.mxu0 0.0
    %927 = vmatpush1.msra.mxu0 %v702
    %928 = vmatprep.subr.mxu0 0.0
    %929 = vmatpush1.msra.mxu0 %v703
    %930 = vmatprep.subr.mxu0 0.0
    %931 = vmatpush1.msra.mxu0 %v704
    %932 = vmatprep.subr.mxu0 0.0
    %933 = vmatpush1.msra.mxu0 %v705
    %934 = vmatprep.subr.mxu0 0.0
    %935 = vmatpush1.msra.mxu0 %v706
    %936 = vmatprep.subr.mxu0 0.0
    %937 = vmatpush1.msra.mxu0 %v707
    %938 = vmatprep.subr.mxu0 0.0
    %939 = vmatpush1.msra.mxu0 %v708
    %940 = vmatprep.subr.mxu0 0.0
    %941 = vmatpush1.msra.mxu0 %v709
    %942 = vmatprep.subr.mxu0 0.0
    %943 = vmatpush1.msra.mxu0 %v710
    %944 = vmatprep.subr.mxu0 0.0
    %945 = vmatpush1.msra.mxu0 0.0
    %946 = vmatprep.subr.mxu0 0.0
    %947 = vmatpush1.msra.mxu0 0.0
    %948 = vmatprep.subr.mxu0 0.0
    %949 = vmatpush1.msra.mxu0 0.0
    %950 = vmatprep.subr.mxu0 0.0
    %951 = vmatpush1.msra.mxu0 0.0
    %952 = vmatprep.subr.mxu0 0.0
    %953 = vmatpush1.msra.mxu0 0.0
    %954 = vmatprep.subr.mxu0 0.0
    %955 = vmatpush1.msra.mxu0 0.0
    %956 = vmatprep.subr.mxu0 0.0
    %957 = vmatpush1.msra.mxu0 0.0
    %958 = vmatprep.subr.mxu0 0.0
    %959 = vmatpush1.msra.mxu0 0.0
    %960 = vmatprep.subr.mxu0 0.0
    %961 = vmatpush1.msra.mxu0 0.0
    %962 = vmatprep.subr.mxu0 0.0
    %963 = vmatpush1.msra.mxu0 0.0
    %964 = vmatprep.subr.mxu0 0.0
    %965 = vmatpush1.msra.mxu0 0.0
    %966 = vmatprep.subr.mxu0 0.0
    %967 = vmatpush1.msra.mxu0 0.0
    %968 = vmatprep.subr.mxu0 0.0
    %969 = vmatpush1.msra.mxu0 0.0
    %970 = vmatprep.subr.mxu0 0.0
    %971 = vmatpush1.msra.mxu0 0.0
    %972 = vmatprep.subr.mxu0 0.0
    %973 = vmatpush1.msra.mxu0 0.0
    %974 = vmatprep.subr.mxu0 0.0
    %975 = vmatpush1.msra.mxu0 0.0
    %976 = vmatprep.mubr.f32.mxu0 0.0
    %977 = vmatmul.mubr.f32.gmra.mrb[0].mxu0 %v477
    %v978 = vpop.f32.mrb[0].mxu0
    %v979 = vadd.f32 %v718, %v978
    %v980 = vpop.f32.mrb[0].mxu0
    %981 = vmatprep.mubr.f32.mxu0 0.0
    %982 = vmatmul.mubr.f32.gmra.mrb[0].mxu0 %v478
    %v983 = vpop.f32.mrb[0].mxu0
    %v984 = vadd.f32 %v718, %v983
    %v985 = vpop.f32.mrb[0].mxu0
    %986 = vdwg.mxu0
    %v987 = vmax.f32 %v979, 0.0
    %v988 = vmax.f32 %v984, 0.0
    %v989 = vmul.f32 %v987, %v801
    %v990 = vmul.f32 %v988, %v801
    %v991 = vsel %vm805, %v989, 0.0
    %992 = vadd.xlane.f32.xlu0 %v991
    %v993 = vpop.xlane.xlu0 %992
    %v994 = vsel %vm805, %v990, 0.0
    %995 = vadd.xlane.f32.xlu0 %v994
    %v996 = vpop.xlane.xlu0 %995
    %v997 = vadd.f32 %v993, %v816
    %v998 = vadd.f32 %v996, %v816
    %999 = vst.msk [vmem:[%s20] sm:$0xff] %vm820, %v997
    %1000 = vst.msk [vmem:[%s20 + $0x8] sm:$0xff] %vm820, %v998
    %1001 = vst [vmem:[#allocation9] sm:$0xff] %v693
    %1002 = vst [vmem:[#allocation9 + $0x8] sm:$0xff] %v694
    %1003 = vst [vmem:[#allocation10] sm:$0xff] %v357
    %1004 = vst [vmem:[#allocation10 + $0x8] sm:$0xff] %v358
    %1005 = vst [vmem:[#allocation12] sm:$0xff] %v477
    %1006 = vst [vmem:[#allocation12 + $0x8] sm:$0xff] %v478
    // Predicated region
    $region86: #{tpu_custom_call.1} parent=1 // pred_check
      _
    $region87: #{tpu_custom_call.1} parent=1 // pred_check_branch
      %1008 = sbr.rel (0) target = $region89
    $region88: #{tpu_custom_call.1} parent=1 // pred_region
      _
    $region89: #{tpu_custom_call.1} parent=1 // pred_fallthru
      _
    // Predicated region
    $region90: #{tpu_custom_call.1} parent=1 // pred_check
      _
    $region91: #{tpu_custom_call.1} parent=1 // pred_check_branch
      %1010 = sbr.rel (0) target = $region93
    $region92: #{tpu_custom_call.1} parent=1 // pred_region
      _
    $region93: #{tpu_custom_call.1} parent=1 // pred_fallthru
      _
    // Predicated region
    $region94: #{tpu_custom_call.1} parent=1 // pred_check
      _
    $region95: #{tpu_custom_call.1} parent=1 // pred_check_branch
      %1012 = sbr.rel (0) target = $region97
    $region96: #{tpu_custom_call.1} parent=1 // pred_region
      _
    $region97: #{tpu_custom_call.1} parent=1 // pred_fallthru
      _
    // Predicated region
    $region98: #{tpu_custom_call.1} parent=1 // pred_check
      _
    $region99: #{tpu_custom_call.1} parent=1 // pred_check_branch
      %1014 = sbr.rel (0) target = $region101
    $region100: #{tpu_custom_call.1} parent=1 // pred_region
      %s1016 = ssub.s32 256, 256
      %1017 = vsyncadd [#allocation5], %s1016
      %s1018 = sshll.u32 [#allocation9], 4
      %s1019 = int_to_ptr.vmem [resolvable:$true] %s1018
      %1024 = dma.vmem_to_hbm [thread:$0]  %s1019, 256, %s21, [#allocation5], 128, 128, 8
    $region101: #{tpu_custom_call.1} parent=1 // pred_fallthru
      _
    // Predicated region
    $region102: #{tpu_custom_call.1} parent=1 // pred_check
      _
    $region103: #{tpu_custom_call.1} parent=1 // pred_check_branch
      %1026 = sbr.rel (0) target = $region105
    $region104: #{tpu_custom_call.1} parent=1 // pred_region
      %s1028 = ssub.s32 256, 256
      %1029 = vsyncadd [#allocation11], %s1028
      %s1030 = sshll.u32 [#allocation10], 4
      %s1031 = int_to_ptr.vmem [resolvable:$true] %s1030
      %1036 = dma.vmem_to_hbm [thread:$0]  %s1031, 256, %s22, [#allocation11], 128, 128, 8
    $region105: #{tpu_custom_call.1} parent=1 // pred_fallthru
      _
    // Predicated region
    $region106: #{tpu_custom_call.1} parent=1 // pred_check
      _
    $region107: #{tpu_custom_call.1} parent=1 // pred_check_branch
      %1038 = sbr.rel (0) target = $region109
    $region108: #{tpu_custom_call.1} parent=1 // pred_region
      %s1040 = ssub.s32 256, 256
      %1041 = vsyncadd [#allocation11], %s1040
      %s1042 = sshll.u32 [#allocation12], 4
      %s1043 = int_to_ptr.vmem [resolvable:$true] %s1042
      %1048 = dma.vmem_to_hbm [thread:$0]  %s1043, 256, %s23, [#allocation11], 128, 128, 8
    $region109: #{tpu_custom_call.1} parent=1 // pred_fallthru
      _
    // Predicated region
    $region110: #{tpu_custom_call.1} parent=1 // pred_check
      _
    $region111: #{tpu_custom_call.1} parent=1 // pred_check_branch
      %1050 = sbr.rel (0) target = $region113
    $region112: #{tpu_custom_call.1} parent=1 // pred_region
      _
    $region113: #{tpu_custom_call.1} parent=1 // pred_fallthru
      _
    // Predicated region
    $region114: #{tpu_custom_call.1} parent=1 // pred_check
      _
    $region115: #{tpu_custom_call.1} parent=1 // pred_check_branch
      %1052 = sbr.rel (0) target = $region117
    $region116: #{tpu_custom_call.1} parent=1 // pred_region
      _
    $region117: #{tpu_custom_call.1} parent=1 // pred_fallthru
      _
    // Predicated region
    $region118: #{tpu_custom_call.1} parent=1 // pred_check
      _
    $region119: #{tpu_custom_call.1} parent=1 // pred_check_branch
      %1054 = sbr.rel (0) target = $region121
    $region120: #{tpu_custom_call.1} parent=1 // pred_region
      _
    $region121: #{tpu_custom_call.1} parent=1 // pred_fallthru
      _
    // Predicated region
    $region122: #{tpu_custom_call.1} parent=1 // pred_check
      _
    $region123: #{tpu_custom_call.1} parent=1 // pred_check_branch
      %1056 = sbr.rel (0) target = $region125
    $region124: #{tpu_custom_call.1} parent=1 // pred_region
      %1057 = dma.done [#allocation5], 256
    $region125: #{tpu_custom_call.1} parent=1 // pred_fallthru
      _
    // Predicated region
    $region126: #{tpu_custom_call.1} parent=1 // pred_check
      _
    $region127: #{tpu_custom_call.1} parent=1 // pred_check_branch
      %1059 = sbr.rel (0) target = $region129
    $region128: #{tpu_custom_call.1} parent=1 // pred_region
      %1060 = dma.done [#allocation11], 256
    $region129: #{tpu_custom_call.1} parent=1 // pred_fallthru
      _
    // Predicated region
    $region130: #{tpu_custom_call.1} parent=1 // pred_check
      _
    $region131: #{tpu_custom_call.1} parent=1 // pred_check_branch
      %1062 = sbr.rel (0) target = $region133
    $region132: #{tpu_custom_call.1} parent=1 // pred_region
      %1063 = dma.done [#allocation11], 256
    $region133: #{tpu_custom_call.1} parent=1 // pred_fallthru
      _
    %1064 = vsyncpa [#allocation4], 1
    %1065 = vsyncpa [#allocation7], 1
    %1066 = vsyncpa [#allocation5], 1
    %1067 = vsyncpa [#allocation11], 1

</llo_original>
